<compile_context>
chip_gen: v6e
topology: v6e:2x2x1
jax: 0.10.0
libtpu: 0.0.40
codegen_flags: <defaults>
</compile_context>

<pallas_src>
import jax
import jax.numpy as jnp
from jax.experimental import pallas as pl
from jax.experimental.pallas import tpu as pltpu

SUBLANES = 8
LANES = 128


def _round_up(n, m):
    return ((n + m - 1) // m) * m


# ----------------------------------------------------------------------------
# Parameter preparation (done once, outside the forward):
#   * transpose weights to (in_dim, 4H) / (H, 4H)
#   * fold b_ih + b_hh into a single bias
#   * permute gate columns (i, f, g, o) -> (i, f, o, g)  [sigmoid | tanh split]
#   * pad the regression head to 128 lane-dense output columns
# ----------------------------------------------------------------------------
def prepare_params(params):
    assert len(params["lstm"]) == 2, "fused kernel assumes num_layers=2"
    lstm = []
    for (w_ih, w_hh, b_ih, b_hh) in params["lstm"]:
        H = w_hh.shape[1]
        perm = jnp.concatenate([jnp.arange(0, 2 * H),        # i, f
                                jnp.arange(3 * H, 4 * H),     # o
                                jnp.arange(2 * H, 3 * H)])    # g
        lstm.append((jnp.transpose(w_ih)[:, perm],            # (D_in, 4H)
                     jnp.transpose(w_hh)[:, perm],            # (H, 4H)
                     (b_ih + b_hh)[perm][None, :]))           # (1, 4H)
    w_reg, b_reg = params["reg"]
    O = w_reg.shape[0]
    H = w_reg.shape[1]
    OP = _round_up(max(O, LANES), LANES)                      # lane-dense width
    wreg = jnp.zeros((H, OP), jnp.float32).at[:, :O].set(jnp.transpose(w_reg))
    breg = jnp.zeros((1, OP), jnp.float32).at[:, :O].set(b_reg[None, :])
    return tuple(lstm) + ((wreg, breg, O),)


# ----------------------------------------------------------------------------
# Fused forward: 2 LSTM layers + Linear head in a single pallas_call.
# ----------------------------------------------------------------------------
def lstm_reg_forward(x, prepared):
    """x: (S, B, input_size); prepared = prepare_params(params)."""
    (wih1, whh1, b1), (wih2, whh2, b2), (wreg, breg, O) = prepared
    S, B, D = x.shape
    H = whh1.shape[0]
    OP = wreg.shape[1]

    # Zero-pad batch to a sublane multiple: aligned per-step slices/stores and
    # fuller MXU rows.  Padded rows are row-independent -> cannot contaminate
    # valid rows; they are sliced off below.
    Bp = _round_up(max(B, SUBLANES), SUBLANES)
    if Bp != B:
        x = jnp.pad(x, ((0, 0), (0, Bp - B), (0, 0)))
    x2d = x.reshape(S * Bp, D)

    def kernel(x_ref, wih1_ref, whh1_ref, b1_ref,
               wih2_ref, whh2_ref, b2_ref, wreg_ref, breg_ref,
               out_ref, h2_sc):
        whh1_v = whh1_ref[...]
        whh2_v = whh2_ref[...]
        wih2_v = wih2_ref[...]
        b2_v = b2_ref[...]

        def cell(pre, h_prev, c_prev, whh):
            # Gate columns already permuted to (i, f, o | g):
            #   sigmoid over the first 3H columns, tanh over the last H.
            g = pre + jnp.dot(h_prev, whh, preferred_element_type=jnp.float32)
            sig = jax.nn.sigmoid(g[:, :3 * H])
            g_g = jnp.tanh(g[:, 3 * H:])
            i_g = sig[:, 0 * H:1 * H]
            f_g = sig[:, 1 * H:2 * H]
            o_g = sig[:, 2 * H:3 * H]
            c = f_g * c_prev + i_g * g_g
            h = o_g * jnp.tanh(c)
            return h, c

        # Layer-1 input projection hoisted for ALL timesteps: one MXU matmul.
        gates1 = jnp.dot(x_ref[...], wih1_ref[...],
                         preferred_element_type=jnp.float32) + b1_ref[...]

        zeros = jnp.zeros((Bp, H), jnp.float32)
        # Prime the pipeline with layer-1 step 0.
        h1, c1 = cell(gates1[0:Bp, :], zeros, zeros, whh1_v)
        h2, c2 = zeros, zeros

        # Interleaved recurrence: iteration t advances layer-1 to step t+1 and
        # layer-2 to step t — two independent chains per basic block.
        for t in range(S):                       # S static & tiny: unrolled
            pre2 = jnp.dot(h1, wih2_v,
                           preferred_element_type=jnp.float32) + b2_v
            if t + 1 < S:
                h1n, c1n = cell(gates1[(t + 1) * Bp:(t + 2) * Bp, :],
                                h1, c1, whh1_v)
            h2, c2 = cell(pre2, h2, c2, whh2_v)
            h2_sc[t * Bp:(t + 1) * Bp, :] = h2   # sublane-aligned (Bp % 8 == 0)
            if t + 1 < S:
                h1, c1 = h1n, c1n

        # Regression head over all rows at once; lane-dense (OP=128) output.
        y = jnp.dot(h2_sc[...], wreg_ref[...],
                    preferred_element_type=jnp.float32) + breg_ref[...]
        out_ref[...] = y.astype(out_ref.dtype)

    def full(shape):
        return pl.BlockSpec(shape, lambda: (0,) * len(shape))

    y2d = pl.pallas_call(
        kernel,
        out_shape=jax.ShapeDtypeStruct((S * Bp, OP), jnp.float32),
        in_specs=[
            full((S * Bp, D)),
            full((D, 4 * H)), full((H, 4 * H)), full((1, 4 * H)),
            full((H, 4 * H)), full((H, 4 * H)), full((1, 4 * H)),
            full((H, OP)), full((1, OP)),
        ],
        out_specs=full((S * Bp, OP)),
        scratch_shapes=[
            pltpu.VMEM((S * Bp, H), jnp.float32),   # layer-2 outputs
        ],
        compiler_params=pltpu.CompilerParams(vmem_limit_bytes=32 * 1024 * 1024),
    )(x2d, wih1, whh1, b1, wih2, whh2, b2, wreg, breg)

    # Drop batch padding and output-lane padding.
    return y2d.reshape(S, Bp, OP)[:, :B, :O]


# ----------------------------------------------------------------------------
# Deterministic parameter init (PyTorch-style uniform(-1/sqrt(H), 1/sqrt(H)))
# ----------------------------------------------------------------------------
def init_params(key, input_size, hidden_size, output_size, num_layers):
    k = 1.0 / jnp.sqrt(hidden_size)
    lstm_params = []
    for layer in range(num_layers):
        d_in = input_size if layer == 0 else hidden_size
        key, k1, k2, k3, k4 = jax.random.split(key, 5)
        lstm_params.append((
            jax.random.uniform(k1, (4 * hidden_size, d_in), jnp.float32, -k, k),
            jax.random.uniform(k2, (4 * hidden_size, hidden_size), jnp.float32, -k, k),
            jax.random.uniform(k3, (4 * hidden_size,), jnp.float32, -k, k),
            jax.random.uniform(k4, (4 * hidden_size,), jnp.float32, -k, k),
        ))
    key, k5, k6 = jax.random.split(key, 3)
    kr = 1.0 / jnp.sqrt(hidden_size)
    reg = (jax.random.uniform(k5, (output_size, hidden_size), jnp.float32, -kr, kr),
           jax.random.uniform(k6, (output_size,), jnp.float32, -kr, kr))
    return {"lstm": lstm_params, "reg": reg}


# ----------------------------------------------------------------------------
# Pure-JAX reference (original PyTorch gate order) for correctness checking
# ----------------------------------------------------------------------------
def lstm_reg_reference(x, params):
    h = x
    for (w_ih, w_hh, b_ih, b_hh) in params["lstm"]:
        H = w_hh.shape[1]
        B = h.shape[1]

        def step(carry, x_t, w_ih=w_ih, w_hh=w_hh, b_ih=b_ih, b_hh=b_hh, H=H):
            hh, cc = carry
            gates = x_t @ w_ih.T + b_ih + hh @ w_hh.T + b_hh
            i = jax.nn.sigmoid(gates[:, :H])
            f = jax.nn.sigmoid(gates[:, H:2 * H])
            g = jnp.tanh(gates[:, 2 * H:3 * H])
            o = jax.nn.sigmoid(gates[:, 3 * H:])
            cc = f * cc + i * g
            hh = o * jnp.tanh(cc)
            return (hh, cc), hh

        init = (jnp.zeros((B, H), jnp.float32), jnp.zeros((B, H), jnp.float32))
        _, h = jax.lax.scan(step, init, h)
    S, B, H = h.shape
    w_reg, b_reg = params["reg"]
    y = h.reshape(S * B, H) @ w_reg.T + b_reg
    return y.reshape(S, B, -1)


if __name__ == "__main__":
    INPUT_SIZE = 8
    HIDDEN_SIZE = 32
    OUTPUT_SIZE = 1
    NUM_LAYERS = 2
    SEQ = 8
    BATCH = 2   # wrapper zero-pads to 8 sublanes; raise to 128+ to fill the MXU

    key = jax.random.PRNGKey(0)
    key, xkey = jax.random.split(key)
    x = jax.random.normal(xkey, (SEQ, BATCH, INPUT_SIZE), dtype=jnp.float32)
    params = init_params(key, INPUT_SIZE, HIDDEN_SIZE, OUTPUT_SIZE, NUM_LAYERS)
    prepared = prepare_params(params)   # transpose + permute + fuse biases ONCE

    y = lstm_reg_forward(x, prepared)
    y = jax.block_until_ready(y)

    y_ref = lstm_reg_reference(x, params)
    assert y.shape == (SEQ, BATCH, OUTPUT_SIZE), y.shape
    assert jnp.allclose(y, y_ref, atol=1e-5, rtol=1e-5), \
        float(jnp.max(jnp.abs(y - y_ref)))

    print("KERNEL_OK")
</pallas_src>

<mosaic_0001>
module attributes {stable_mosaic.version = 11 : i64} {
  func.func @kernel(%arg0: memref<64x8xf32, #tpu.memory_space<vmem>>, %arg1: memref<8x128xf32, #tpu.memory_space<vmem>>, %arg2: memref<32x128xf32, #tpu.memory_space<vmem>>, %arg3: memref<1x128xf32, #tpu.memory_space<vmem>>, %arg4: memref<32x128xf32, #tpu.memory_space<vmem>>, %arg5: memref<32x128xf32, #tpu.memory_space<vmem>>, %arg6: memref<1x128xf32, #tpu.memory_space<vmem>>, %arg7: memref<32x128xf32, #tpu.memory_space<vmem>>, %arg8: memref<1x128xf32, #tpu.memory_space<vmem>>, %arg9: memref<64x128xf32, #tpu.memory_space<vmem>>, %arg10: memref<64x32xf32, #tpu.memory_space<vmem>>) attributes {dimension_semantics = [], scalar_prefetch = 0 : i64, scratch_operands = 1 : i64, tpu.core_type = #tpu.core_type<tc>} {
    %c0 = arith.constant 0 : index
    %c0_0 = arith.constant 0 : index
    %0 = vector.load %arg2[%c0, %c0_0] : memref<32x128xf32, #tpu.memory_space<vmem>>, vector<32x128xf32>
    %c0_1 = arith.constant 0 : index
    %c0_2 = arith.constant 0 : index
    %1 = vector.load %arg5[%c0_1, %c0_2] : memref<32x128xf32, #tpu.memory_space<vmem>>, vector<32x128xf32>
    %c0_3 = arith.constant 0 : index
    %c0_4 = arith.constant 0 : index
    %2 = vector.load %arg4[%c0_3, %c0_4] : memref<32x128xf32, #tpu.memory_space<vmem>>, vector<32x128xf32>
    %c0_5 = arith.constant 0 : index
    %c0_6 = arith.constant 0 : index
    %3 = vector.load %arg6[%c0_5, %c0_6] : memref<1x128xf32, #tpu.memory_space<vmem>>, vector<1x128xf32>
    %c0_7 = arith.constant 0 : index
    %c0_8 = arith.constant 0 : index
    %4 = vector.load %arg0[%c0_7, %c0_8] : memref<64x8xf32, #tpu.memory_space<vmem>>, vector<64x8xf32>
    %c0_9 = arith.constant 0 : index
    %c0_10 = arith.constant 0 : index
    %5 = vector.load %arg1[%c0_9, %c0_10] : memref<8x128xf32, #tpu.memory_space<vmem>>, vector<8x128xf32>
    %cst = arith.constant dense<0.000000e+00> : vector<64x128xf32>
    %6 = tpu.matmul %4, %5, %cst {dimension_numbers = #tpu.dot_dimension_numbers<[1], [0], [0], [1], [0, 0, 1, 1], [], []>} : vector<64x8xf32>, vector<8x128xf32>, vector<64x128xf32> -> vector<64x128xf32>
    %c0_11 = arith.constant 0 : index
    %c0_12 = arith.constant 0 : index
    %7 = vector.load %arg3[%c0_11, %c0_12] : memref<1x128xf32, #tpu.memory_space<vmem>>, vector<1x128xf32>
    %8 = vector.broadcast %7 : vector<1x128xf32> to vector<64x128xf32>
    %9 = arith.addf %6, %8 : vector<64x128xf32>
    %cst_13 = arith.constant 0.000000e+00 : f32
    %10 = vector.broadcast %cst_13 : f32 to vector<8x32xf32>
    %11 = vector.extract_strided_slice %9 {offsets = [0, 0], sizes = [8, 128], strides = [1, 1]} : vector<64x128xf32> to vector<8x128xf32>
    %cst_14 = arith.constant dense<0.000000e+00> : vector<8x128xf32>
    %12 = tpu.matmul %10, %0, %cst_14 {dimension_numbers = #tpu.dot_dimension_numbers<[1], [0], [0], [1], [0, 0, 1, 1], [], []>} : vector<8x32xf32>, vector<32x128xf32>, vector<8x128xf32> -> vector<8x128xf32>
    %13 = arith.addf %11, %12 : vector<8x128xf32>
    %14 = vector.extract_strided_slice %13 {offsets = [0, 0], sizes = [8, 96], strides = [1, 1]} : vector<8x128xf32> to vector<8x96xf32>
    %15 = arith.negf %14 : vector<8x96xf32>
    %16 = math.exp %15 : vector<8x96xf32>
    %cst_15 = arith.constant 1.000000e+00 : f32
    %17 = vector.broadcast %cst_15 : f32 to vector<8x96xf32>
    %18 = arith.addf %17, %16 : vector<8x96xf32>
    %19 = arith.divf %17, %18 : vector<8x96xf32>
    %20 = vector.extract_strided_slice %13 {offsets = [0, 96], sizes = [8, 32], strides = [1, 1]} : vector<8x128xf32> to vector<8x32xf32>
    %21 = math.tanh %20 : vector<8x32xf32>
    %22 = vector.extract_strided_slice %19 {offsets = [0, 0], sizes = [8, 32], strides = [1, 1]} : vector<8x96xf32> to vector<8x32xf32>
    %23 = vector.extract_strided_slice %19 {offsets = [0, 32], sizes = [8, 32], strides = [1, 1]} : vector<8x96xf32> to vector<8x32xf32>
    %24 = vector.extract_strided_slice %19 {offsets = [0, 64], sizes = [8, 32], strides = [1, 1]} : vector<8x96xf32> to vector<8x32xf32>
    %25 = arith.mulf %23, %10 : vector<8x32xf32>
    %26 = arith.mulf %22, %21 : vector<8x32xf32>
    %27 = arith.addf %25, %26 : vector<8x32xf32>
    %28 = math.tanh %27 : vector<8x32xf32>
    %29 = arith.mulf %24, %28 : vector<8x32xf32>
    %cst_16 = arith.constant dense<0.000000e+00> : vector<8x128xf32>
    %30 = tpu.matmul %29, %2, %cst_16 {dimension_numbers = #tpu.dot_dimension_numbers<[1], [0], [0], [1], [0, 0, 1, 1], [], []>} : vector<8x32xf32>, vector<32x128xf32>, vector<8x128xf32> -> vector<8x128xf32>
    %31 = vector.broadcast %3 : vector<1x128xf32> to vector<8x128xf32>
    %32 = arith.addf %30, %31 : vector<8x128xf32>
    %33 = vector.extract_strided_slice %9 {offsets = [8, 0], sizes = [8, 128], strides = [1, 1]} : vector<64x128xf32> to vector<8x128xf32>
    %cst_17 = arith.constant dense<0.000000e+00> : vector<8x128xf32>
    %34 = tpu.matmul %29, %0, %cst_17 {dimension_numbers = #tpu.dot_dimension_numbers<[1], [0], [0], [1], [0, 0, 1, 1], [], []>} : vector<8x32xf32>, vector<32x128xf32>, vector<8x128xf32> -> vector<8x128xf32>
    %35 = arith.addf %33, %34 : vector<8x128xf32>
    %36 = vector.extract_strided_slice %35 {offsets = [0, 0], sizes = [8, 96], strides = [1, 1]} : vector<8x128xf32> to vector<8x96xf32>
    %37 = arith.negf %36 : vector<8x96xf32>
    %38 = math.exp %37 : vector<8x96xf32>
    %cst_18 = arith.constant 1.000000e+00 : f32
    %39 = vector.broadcast %cst_18 : f32 to vector<8x96xf32>
    %40 = arith.addf %39, %38 : vector<8x96xf32>
    %41 = arith.divf %39, %40 : vector<8x96xf32>
    %42 = vector.extract_strided_slice %35 {offsets = [0, 96], sizes = [8, 32], strides = [1, 1]} : vector<8x128xf32> to vector<8x32xf32>
    %43 = math.tanh %42 : vector<8x32xf32>
    %44 = vector.extract_strided_slice %41 {offsets = [0, 0], sizes = [8, 32], strides = [1, 1]} : vector<8x96xf32> to vector<8x32xf32>
    %45 = vector.extract_strided_slice %41 {offsets = [0, 32], sizes = [8, 32], strides = [1, 1]} : vector<8x96xf32> to vector<8x32xf32>
    %46 = vector.extract_strided_slice %41 {offsets = [0, 64], sizes = [8, 32], strides = [1, 1]} : vector<8x96xf32> to vector<8x32xf32>
    %47 = arith.mulf %45, %27 : vector<8x32xf32>
    %48 = arith.mulf %44, %43 : vector<8x32xf32>
    %49 = arith.addf %47, %48 : vector<8x32xf32>
    %50 = math.tanh %49 : vector<8x32xf32>
    %51 = arith.mulf %46, %50 : vector<8x32xf32>
    %cst_19 = arith.constant dense<0.000000e+00> : vector<8x128xf32>
    %52 = tpu.matmul %10, %1, %cst_19 {dimension_numbers = #tpu.dot_dimension_numbers<[1], [0], [0], [1], [0, 0, 1, 1], [], []>} : vector<8x32xf32>, vector<32x128xf32>, vector<8x128xf32> -> vector<8x128xf32>
    %53 = arith.addf %32, %52 : vector<8x128xf32>
    %54 = vector.extract_strided_slice %53 {offsets = [0, 0], sizes = [8, 96], strides = [1, 1]} : vector<8x128xf32> to vector<8x96xf32>
    %55 = arith.negf %54 : vector<8x96xf32>
    %56 = math.exp %55 : vector<8x96xf32>
    %cst_20 = arith.constant 1.000000e+00 : f32
    %57 = vector.broadcast %cst_20 : f32 to vector<8x96xf32>
    %58 = arith.addf %57, %56 : vector<8x96xf32>
    %59 = arith.divf %57, %58 : vector<8x96xf32>
    %60 = vector.extract_strided_slice %53 {offsets = [0, 96], sizes = [8, 32], strides = [1, 1]} : vector<8x128xf32> to vector<8x32xf32>
    %61 = math.tanh %60 : vector<8x32xf32>
    %62 = vector.extract_strided_slice %59 {offsets = [0, 0], sizes = [8, 32], strides = [1, 1]} : vector<8x96xf32> to vector<8x32xf32>
    %63 = vector.extract_strided_slice %59 {offsets = [0, 32], sizes = [8, 32], strides = [1, 1]} : vector<8x96xf32> to vector<8x32xf32>
    %64 = vector.extract_strided_slice %59 {offsets = [0, 64], sizes = [8, 32], strides = [1, 1]} : vector<8x96xf32> to vector<8x32xf32>
    %65 = arith.mulf %63, %10 : vector<8x32xf32>
    %66 = arith.mulf %62, %61 : vector<8x32xf32>
    %67 = arith.addf %65, %66 : vector<8x32xf32>
    %68 = math.tanh %67 : vector<8x32xf32>
    %69 = arith.mulf %64, %68 : vector<8x32xf32>
    %c0_21 = arith.constant 0 : index
    %c0_22 = arith.constant 0 : index
    %70 = vector.load %arg10[%c0_21, %c0_22] : memref<64x32xf32, #tpu.memory_space<vmem>>, vector<8x32xf32>
    tpu.vector_store %arg10[%c0_21, %c0_22], %69 {strides = array<i32>} : memref<64x32xf32, #tpu.memory_space<vmem>>, vector<8x32xf32>,
    %cst_23 = arith.constant dense<0.000000e+00> : vector<8x128xf32>
    %71 = tpu.matmul %51, %2, %cst_23 {dimension_numbers = #tpu.dot_dimension_numbers<[1], [0], [0], [1], [0, 0, 1, 1], [], []>} : vector<8x32xf32>, vector<32x128xf32>, vector<8x128xf32> -> vector<8x128xf32>
    %72 = vector.broadcast %3 : vector<1x128xf32> to vector<8x128xf32>
    %73 = arith.addf %71, %72 : vector<8x128xf32>
    %74 = vector.extract_strided_slice %9 {offsets = [16, 0], sizes = [8, 128], strides = [1, 1]} : vector<64x128xf32> to vector<8x128xf32>
    %cst_24 = arith.constant dense<0.000000e+00> : vector<8x128xf32>
    %75 = tpu.matmul %51, %0, %cst_24 {dimension_numbers = #tpu.dot_dimension_numbers<[1], [0], [0], [1], [0, 0, 1, 1], [], []>} : vector<8x32xf32>, vector<32x128xf32>, vector<8x128xf32> -> vector<8x128xf32>
    %76 = arith.addf %74, %75 : vector<8x128xf32>
    %77 = vector.extract_strided_slice %76 {offsets = [0, 0], sizes = [8, 96], strides = [1, 1]} : vector<8x128xf32> to vector<8x96xf32>
    %78 = arith.negf %77 : vector<8x96xf32>
    %79 = math.exp %78 : vector<8x96xf32>
    %cst_25 = arith.constant 1.000000e+00 : f32
    %80 = vector.broadcast %cst_25 : f32 to vector<8x96xf32>
    %81 = arith.addf %80, %79 : vector<8x96xf32>
    %82 = arith.divf %80, %81 : vector<8x96xf32>
    %83 = vector.extract_strided_slice %76 {offsets = [0, 96], sizes = [8, 32], strides = [1, 1]} : vector<8x128xf32> to vector<8x32xf32>
    %84 = math.tanh %83 : vector<8x32xf32>
    %85 = vector.extract_strided_slice %82 {offsets = [0, 0], sizes = [8, 32], strides = [1, 1]} : vector<8x96xf32> to vector<8x32xf32>
    %86 = vector.extract_strided_slice %82 {offsets = [0, 32], sizes = [8, 32], strides = [1, 1]} : vector<8x96xf32> to vector<8x32xf32>
    %87 = vector.extract_strided_slice %82 {offsets = [0, 64], sizes = [8, 32], strides = [1, 1]} : vector<8x96xf32> to vector<8x32xf32>
    %88 = arith.mulf %86, %49 : vector<8x32xf32>
    %89 = arith.mulf %85, %84 : vector<8x32xf32>
    %90 = arith.addf %88, %89 : vector<8x32xf32>
    %91 = math.tanh %90 : vector<8x32xf32>
    %92 = arith.mulf %87, %91 : vector<8x32xf32>
    %cst_26 = arith.constant dense<0.000000e+00> : vector<8x128xf32>
    %93 = tpu.matmul %69, %1, %cst_26 {dimension_numbers = #tpu.dot_dimension_numbers<[1], [0], [0], [1], [0, 0, 1, 1], [], []>} : vector<8x32xf32>, vector<32x128xf32>, vector<8x128xf32> -> vector<8x128xf32>
    %94 = arith.addf %73, %93 : vector<8x128xf32>
    %95 = vector.extract_strided_slice %94 {offsets = [0, 0], sizes = [8, 96], strides = [1, 1]} : vector<8x128xf32> to vector<8x96xf32>
    %96 = arith.negf %95 : vector<8x96xf32>
    %97 = math.exp %96 : vector<8x96xf32>
    %cst_27 = arith.constant 1.000000e+00 : f32
    %98 = vector.broadcast %cst_27 : f32 to vector<8x96xf32>
    %99 = arith.addf %98, %97 : vector<8x96xf32>
    %100 = arith.divf %98, %99 : vector<8x96xf32>
    %101 = vector.extract_strided_slice %94 {offsets = [0, 96], sizes = [8, 32], strides = [1, 1]} : vector<8x128xf32> to vector<8x32xf32>
    %102 = math.tanh %101 : vector<8x32xf32>
    %103 = vector.extract_strided_slice %100 {offsets = [0, 0], sizes = [8, 32], strides = [1, 1]} : vector<8x96xf32> to vector<8x32xf32>
    %104 = vector.extract_strided_slice %100 {offsets = [0, 32], sizes = [8, 32], strides = [1, 1]} : vector<8x96xf32> to vector<8x32xf32>
    %105 = vector.extract_strided_slice %100 {offsets = [0, 64], sizes = [8, 32], strides = [1, 1]} : vector<8x96xf32> to vector<8x32xf32>
    %106 = arith.mulf %104, %67 : vector<8x32xf32>
    %107 = arith.mulf %103, %102 : vector<8x32xf32>
    %108 = arith.addf %106, %107 : vector<8x32xf32>
    %109 = math.tanh %108 : vector<8x32xf32>
    %110 = arith.mulf %105, %109 : vector<8x32xf32>
    %c8 = arith.constant 8 : index
    %c0_28 = arith.constant 0 : index
    %111 = vector.load %arg10[%c8, %c0_28] : memref<64x32xf32, #tpu.memory_space<vmem>>, vector<8x32xf32>
    tpu.vector_store %arg10[%c8, %c0_28], %110 {strides = array<i32>} : memref<64x32xf32, #tpu.memory_space<vmem>>, vector<8x32xf32>,
    %cst_29 = arith.constant dense<0.000000e+00> : vector<8x128xf32>
    %112 = tpu.matmul %92, %2, %cst_29 {dimension_numbers = #tpu.dot_dimension_numbers<[1], [0], [0], [1], [0, 0, 1, 1], [], []>} : vector<8x32xf32>, vector<32x128xf32>, vector<8x128xf32> -> vector<8x128xf32>
    %113 = vector.broadcast %3 : vector<1x128xf32> to vector<8x128xf32>
    %114 = arith.addf %112, %113 : vector<8x128xf32>
    %115 = vector.extract_strided_slice %9 {offsets = [24, 0], sizes = [8, 128], strides = [1, 1]} : vector<64x128xf32> to vector<8x128xf32>
    %cst_30 = arith.constant dense<0.000000e+00> : vector<8x128xf32>
    %116 = tpu.matmul %92, %0, %cst_30 {dimension_numbers = #tpu.dot_dimension_numbers<[1], [0], [0], [1], [0, 0, 1, 1], [], []>} : vector<8x32xf32>, vector<32x128xf32>, vector<8x128xf32> -> vector<8x128xf32>
    %117 = arith.addf %115, %116 : vector<8x128xf32>
    %118 = vector.extract_strided_slice %117 {offsets = [0, 0], sizes = [8, 96], strides = [1, 1]} : vector<8x128xf32> to vector<8x96xf32>
    %119 = arith.negf %118 : vector<8x96xf32>
    %120 = math.exp %119 : vector<8x96xf32>
    %cst_31 = arith.constant 1.000000e+00 : f32
    %121 = vector.broadcast %cst_31 : f32 to vector<8x96xf32>
    %122 = arith.addf %121, %120 : vector<8x96xf32>
    %123 = arith.divf %121, %122 : vector<8x96xf32>
    %124 = vector.extract_strided_slice %117 {offsets = [0, 96], sizes = [8, 32], strides = [1, 1]} : vector<8x128xf32> to vector<8x32xf32>
    %125 = math.tanh %124 : vector<8x32xf32>
    %126 = vector.extract_strided_slice %123 {offsets = [0, 0], sizes = [8, 32], strides = [1, 1]} : vector<8x96xf32> to vector<8x32xf32>
    %127 = vector.extract_strided_slice %123 {offsets = [0, 32], sizes = [8, 32], strides = [1, 1]} : vector<8x96xf32> to vector<8x32xf32>
    %128 = vector.extract_strided_slice %123 {offsets = [0, 64], sizes = [8, 32], strides = [1, 1]} : vector<8x96xf32> to vector<8x32xf32>
    %129 = arith.mulf %127, %90 : vector<8x32xf32>
    %130 = arith.mulf %126, %125 : vector<8x32xf32>
    %131 = arith.addf %129, %130 : vector<8x32xf32>
    %132 = math.tanh %131 : vector<8x32xf32>
    %133 = arith.mulf %128, %132 : vector<8x32xf32>
    %cst_32 = arith.constant dense<0.000000e+00> : vector<8x128xf32>
    %134 = tpu.matmul %110, %1, %cst_32 {dimension_numbers = #tpu.dot_dimension_numbers<[1], [0], [0], [1], [0, 0, 1, 1], [], []>} : vector<8x32xf32>, vector<32x128xf32>, vector<8x128xf32> -> vector<8x128xf32>
    %135 = arith.addf %114, %134 : vector<8x128xf32>
    %136 = vector.extract_strided_slice %135 {offsets = [0, 0], sizes = [8, 96], strides = [1, 1]} : vector<8x128xf32> to vector<8x96xf32>
    %137 = arith.negf %136 : vector<8x96xf32>
    %138 = math.exp %137 : vector<8x96xf32>
    %cst_33 = arith.constant 1.000000e+00 : f32
    %139 = vector.broadcast %cst_33 : f32 to vector<8x96xf32>
    %140 = arith.addf %139, %138 : vector<8x96xf32>
    %141 = arith.divf %139, %140 : vector<8x96xf32>
    %142 = vector.extract_strided_slice %135 {offsets = [0, 96], sizes = [8, 32], strides = [1, 1]} : vector<8x128xf32> to vector<8x32xf32>
    %143 = math.tanh %142 : vector<8x32xf32>
    %144 = vector.extract_strided_slice %141 {offsets = [0, 0], sizes = [8, 32], strides = [1, 1]} : vector<8x96xf32> to vector<8x32xf32>
    %145 = vector.extract_strided_slice %141 {offsets = [0, 32], sizes = [8, 32], strides = [1, 1]} : vector<8x96xf32> to vector<8x32xf32>
    %146 = vector.extract_strided_slice %141 {offsets = [0, 64], sizes = [8, 32], strides = [1, 1]} : vector<8x96xf32> to vector<8x32xf32>
    %147 = arith.mulf %145, %108 : vector<8x32xf32>
    %148 = arith.mulf %144, %143 : vector<8x32xf32>
    %149 = arith.addf %147, %148 : vector<8x32xf32>
    %150 = math.tanh %149 : vector<8x32xf32>
    %151 = arith.mulf %146, %150 : vector<8x32xf32>
    %c16 = arith.constant 16 : index
    %c0_34 = arith.constant 0 : index
    %152 = vector.load %arg10[%c16, %c0_34] : memref<64x32xf32, #tpu.memory_space<vmem>>, vector<8x32xf32>
    tpu.vector_store %arg10[%c16, %c0_34], %151 {strides = array<i32>} : memref<64x32xf32, #tpu.memory_space<vmem>>, vector<8x32xf32>,
    %cst_35 = arith.constant dense<0.000000e+00> : vector<8x128xf32>
    %153 = tpu.matmul %133, %2, %cst_35 {dimension_numbers = #tpu.dot_dimension_numbers<[1], [0], [0], [1], [0, 0, 1, 1], [], []>} : vector<8x32xf32>, vector<32x128xf32>, vector<8x128xf32> -> vector<8x128xf32>
    %154 = vector.broadcast %3 : vector<1x128xf32> to vector<8x128xf32>
    %155 = arith.addf %153, %154 : vector<8x128xf32>
    %156 = vector.extract_strided_slice %9 {offsets = [32, 0], sizes = [8, 128], strides = [1, 1]} : vector<64x128xf32> to vector<8x128xf32>
    %cst_36 = arith.constant dense<0.000000e+00> : vector<8x128xf32>
    %157 = tpu.matmul %133, %0, %cst_36 {dimension_numbers = #tpu.dot_dimension_numbers<[1], [0], [0], [1], [0, 0, 1, 1], [], []>} : vector<8x32xf32>, vector<32x128xf32>, vector<8x128xf32> -> vector<8x128xf32>
    %158 = arith.addf %156, %157 : vector<8x128xf32>
    %159 = vector.extract_strided_slice %158 {offsets = [0, 0], sizes = [8, 96], strides = [1, 1]} : vector<8x128xf32> to vector<8x96xf32>
    %160 = arith.negf %159 : vector<8x96xf32>
    %161 = math.exp %160 : vector<8x96xf32>
    %cst_37 = arith.constant 1.000000e+00 : f32
    %162 = vector.broadcast %cst_37 : f32 to vector<8x96xf32>
    %163 = arith.addf %162, %161 : vector<8x96xf32>
    %164 = arith.divf %162, %163 : vector<8x96xf32>
    %165 = vector.extract_strided_slice %158 {offsets = [0, 96], sizes = [8, 32], strides = [1, 1]} : vector<8x128xf32> to vector<8x32xf32>
    %166 = math.tanh %165 : vector<8x32xf32>
    %167 = vector.extract_strided_slice %164 {offsets = [0, 0], sizes = [8, 32], strides = [1, 1]} : vector<8x96xf32> to vector<8x32xf32>
    %168 = vector.extract_strided_slice %164 {offsets = [0, 32], sizes = [8, 32], strides = [1, 1]} : vector<8x96xf32> to vector<8x32xf32>
    %169 = vector.extract_strided_slice %164 {offsets = [0, 64], sizes = [8, 32], strides = [1, 1]} : vector<8x96xf32> to vector<8x32xf32>
    %170 = arith.mulf %168, %131 : vector<8x32xf32>
    %171 = arith.mulf %167, %166 : vector<8x32xf32>
    %172 = arith.addf %170, %171 : vector<8x32xf32>
    %173 = math.tanh %172 : vector<8x32xf32>
    %174 = arith.mulf %169, %173 : vector<8x32xf32>
    %cst_38 = arith.constant dense<0.000000e+00> : vector<8x128xf32>
    %175 = tpu.matmul %151, %1, %cst_38 {dimension_numbers = #tpu.dot_dimension_numbers<[1], [0], [0], [1], [0, 0, 1, 1], [], []>} : vector<8x32xf32>, vector<32x128xf32>, vector<8x128xf32> -> vector<8x128xf32>
    %176 = arith.addf %155, %175 : vector<8x128xf32>
    %177 = vector.extract_strided_slice %176 {offsets = [0, 0], sizes = [8, 96], strides = [1, 1]} : vector<8x128xf32> to vector<8x96xf32>
    %178 = arith.negf %177 : vector<8x96xf32>
    %179 = math.exp %178 : vector<8x96xf32>
    %cst_39 = arith.constant 1.000000e+00 : f32
    %180 = vector.broadcast %cst_39 : f32 to vector<8x96xf32>
    %181 = arith.addf %180, %179 : vector<8x96xf32>
    %182 = arith.divf %180, %181 : vector<8x96xf32>
    %183 = vector.extract_strided_slice %176 {offsets = [0, 96], sizes = [8, 32], strides = [1, 1]} : vector<8x128xf32> to vector<8x32xf32>
    %184 = math.tanh %183 : vector<8x32xf32>
    %185 = vector.extract_strided_slice %182 {offsets = [0, 0], sizes = [8, 32], strides = [1, 1]} : vector<8x96xf32> to vector<8x32xf32>
    %186 = vector.extract_strided_slice %182 {offsets = [0, 32], sizes = [8, 32], strides = [1, 1]} : vector<8x96xf32> to vector<8x32xf32>
    %187 = vector.extract_strided_slice %182 {offsets = [0, 64], sizes = [8, 32], strides = [1, 1]} : vector<8x96xf32> to vector<8x32xf32>
    %188 = arith.mulf %186, %149 : vector<8x32xf32>
    %189 = arith.mulf %185, %184 : vector<8x32xf32>
    %190 = arith.addf %188, %189 : vector<8x32xf32>
    %191 = math.tanh %190 : vector<8x32xf32>
    %192 = arith.mulf %187, %191 : vector<8x32xf32>
    %c24 = arith.constant 24 : index
    %c0_40 = arith.constant 0 : index
    %193 = vector.load %arg10[%c24, %c0_40] : memref<64x32xf32, #tpu.memory_space<vmem>>, vector<8x32xf32>
    tpu.vector_store %arg10[%c24, %c0_40], %192 {strides = array<i32>} : memref<64x32xf32, #tpu.memory_space<vmem>>, vector<8x32xf32>,
    %cst_41 = arith.constant dense<0.000000e+00> : vector<8x128xf32>
    %194 = tpu.matmul %174, %2, %cst_41 {dimension_numbers = #tpu.dot_dimension_numbers<[1], [0], [0], [1], [0, 0, 1, 1], [], []>} : vector<8x32xf32>, vector<32x128xf32>, vector<8x128xf32> -> vector<8x128xf32>
    %195 = vector.broadcast %3 : vector<1x128xf32> to vector<8x128xf32>
    %196 = arith.addf %194, %195 : vector<8x128xf32>
    %197 = vector.extract_strided_slice %9 {offsets = [40, 0], sizes = [8, 128], strides = [1, 1]} : vector<64x128xf32> to vector<8x128xf32>
    %cst_42 = arith.constant dense<0.000000e+00> : vector<8x128xf32>
    %198 = tpu.matmul %174, %0, %cst_42 {dimension_numbers = #tpu.dot_dimension_numbers<[1], [0], [0], [1], [0, 0, 1, 1], [], []>} : vector<8x32xf32>, vector<32x128xf32>, vector<8x128xf32> -> vector<8x128xf32>
    %199 = arith.addf %197, %198 : vector<8x128xf32>
    %200 = vector.extract_strided_slice %199 {offsets = [0, 0], sizes = [8, 96], strides = [1, 1]} : vector<8x128xf32> to vector<8x96xf32>
    %201 = arith.negf %200 : vector<8x96xf32>
    %202 = math.exp %201 : vector<8x96xf32>
    %cst_43 = arith.constant 1.000000e+00 : f32
    %203 = vector.broadcast %cst_43 : f32 to vector<8x96xf32>
    %204 = arith.addf %203, %202 : vector<8x96xf32>
    %205 = arith.divf %203, %204 : vector<8x96xf32>
    %206 = vector.extract_strided_slice %199 {offsets = [0, 96], sizes = [8, 32], strides = [1, 1]} : vector<8x128xf32> to vector<8x32xf32>
    %207 = math.tanh %206 : vector<8x32xf32>
    %208 = vector.extract_strided_slice %205 {offsets = [0, 0], sizes = [8, 32], strides = [1, 1]} : vector<8x96xf32> to vector<8x32xf32>
    %209 = vector.extract_strided_slice %205 {offsets = [0, 32], sizes = [8, 32], strides = [1, 1]} : vector<8x96xf32> to vector<8x32xf32>
    %210 = vector.extract_strided_slice %205 {offsets = [0, 64], sizes = [8, 32], strides = [1, 1]} : vector<8x96xf32> to vector<8x32xf32>
    %211 = arith.mulf %209, %172 : vector<8x32xf32>
    %212 = arith.mulf %208, %207 : vector<8x32xf32>
    %213 = arith.addf %211, %212 : vector<8x32xf32>
    %214 = math.tanh %213 : vector<8x32xf32>
    %215 = arith.mulf %210, %214 : vector<8x32xf32>
    %cst_44 = arith.constant dense<0.000000e+00> : vector<8x128xf32>
    %216 = tpu.matmul %192, %1, %cst_44 {dimension_numbers = #tpu.dot_dimension_numbers<[1], [0], [0], [1], [0, 0, 1, 1], [], []>} : vector<8x32xf32>, vector<32x128xf32>, vector<8x128xf32> -> vector<8x128xf32>
    %217 = arith.addf %196, %216 : vector<8x128xf32>
    %218 = vector.extract_strided_slice %217 {offsets = [0, 0], sizes = [8, 96], strides = [1, 1]} : vector<8x128xf32> to vector<8x96xf32>
    %219 = arith.negf %218 : vector<8x96xf32>
    %220 = math.exp %219 : vector<8x96xf32>
    %cst_45 = arith.constant 1.000000e+00 : f32
    %221 = vector.broadcast %cst_45 : f32 to vector<8x96xf32>
    %222 = arith.addf %221, %220 : vector<8x96xf32>
    %223 = arith.divf %221, %222 : vector<8x96xf32>
    %224 = vector.extract_strided_slice %217 {offsets = [0, 96], sizes = [8, 32], strides = [1, 1]} : vector<8x128xf32> to vector<8x32xf32>
    %225 = math.tanh %224 : vector<8x32xf32>
    %226 = vector.extract_strided_slice %223 {offsets = [0, 0], sizes = [8, 32], strides = [1, 1]} : vector<8x96xf32> to vector<8x32xf32>
    %227 = vector.extract_strided_slice %223 {offsets = [0, 32], sizes = [8, 32], strides = [1, 1]} : vector<8x96xf32> to vector<8x32xf32>
    %228 = vector.extract_strided_slice %223 {offsets = [0, 64], sizes = [8, 32], strides = [1, 1]} : vector<8x96xf32> to vector<8x32xf32>
    %229 = arith.mulf %227, %190 : vector<8x32xf32>
    %230 = arith.mulf %226, %225 : vector<8x32xf32>
    %231 = arith.addf %229, %230 : vector<8x32xf32>
    %232 = math.tanh %231 : vector<8x32xf32>
    %233 = arith.mulf %228, %232 : vector<8x32xf32>
    %c32 = arith.constant 32 : index
    %c0_46 = arith.constant 0 : index
    %234 = vector.load %arg10[%c32, %c0_46] : memref<64x32xf32, #tpu.memory_space<vmem>>, vector<8x32xf32>
    tpu.vector_store %arg10[%c32, %c0_46], %233 {strides = array<i32>} : memref<64x32xf32, #tpu.memory_space<vmem>>, vector<8x32xf32>,
    %cst_47 = arith.constant dense<0.000000e+00> : vector<8x128xf32>
    %235 = tpu.matmul %215, %2, %cst_47 {dimension_numbers = #tpu.dot_dimension_numbers<[1], [0], [0], [1], [0, 0, 1, 1], [], []>} : vector<8x32xf32>, vector<32x128xf32>, vector<8x128xf32> -> vector<8x128xf32>
    %236 = vector.broadcast %3 : vector<1x128xf32> to vector<8x128xf32>
    %237 = arith.addf %235, %236 : vector<8x128xf32>
    %238 = vector.extract_strided_slice %9 {offsets = [48, 0], sizes = [8, 128], strides = [1, 1]} : vector<64x128xf32> to vector<8x128xf32>
    %cst_48 = arith.constant dense<0.000000e+00> : vector<8x128xf32>
    %239 = tpu.matmul %215, %0, %cst_48 {dimension_numbers = #tpu.dot_dimension_numbers<[1], [0], [0], [1], [0, 0, 1, 1], [], []>} : vector<8x32xf32>, vector<32x128xf32>, vector<8x128xf32> -> vector<8x128xf32>
    %240 = arith.addf %238, %239 : vector<8x128xf32>
    %241 = vector.extract_strided_slice %240 {offsets = [0, 0], sizes = [8, 96], strides = [1, 1]} : vector<8x128xf32> to vector<8x96xf32>
    %242 = arith.negf %241 : vector<8x96xf32>
    %243 = math.exp %242 : vector<8x96xf32>
    %cst_49 = arith.constant 1.000000e+00 : f32
    %244 = vector.broadcast %cst_49 : f32 to vector<8x96xf32>
    %245 = arith.addf %244, %243 : vector<8x96xf32>
    %246 = arith.divf %244, %245 : vector<8x96xf32>
    %247 = vector.extract_strided_slice %240 {offsets = [0, 96], sizes = [8, 32], strides = [1, 1]} : vector<8x128xf32> to vector<8x32xf32>
    %248 = math.tanh %247 : vector<8x32xf32>
    %249 = vector.extract_strided_slice %246 {offsets = [0, 0], sizes = [8, 32], strides = [1, 1]} : vector<8x96xf32> to vector<8x32xf32>
    %250 = vector.extract_strided_slice %246 {offsets = [0, 32], sizes = [8, 32], strides = [1, 1]} : vector<8x96xf32> to vector<8x32xf32>
    %251 = vector.extract_strided_slice %246 {offsets = [0, 64], sizes = [8, 32], strides = [1, 1]} : vector<8x96xf32> to vector<8x32xf32>
    %252 = arith.mulf %250, %213 : vector<8x32xf32>
    %253 = arith.mulf %249, %248 : vector<8x32xf32>
    %254 = arith.addf %252, %253 : vector<8x32xf32>
    %255 = math.tanh %254 : vector<8x32xf32>
    %256 = arith.mulf %251, %255 : vector<8x32xf32>
    %cst_50 = arith.constant dense<0.000000e+00> : vector<8x128xf32>
    %257 = tpu.matmul %233, %1, %cst_50 {dimension_numbers = #tpu.dot_dimension_numbers<[1], [0], [0], [1], [0, 0, 1, 1], [], []>} : vector<8x32xf32>, vector<32x128xf32>, vector<8x128xf32> -> vector<8x128xf32>
    %258 = arith.addf %237, %257 : vector<8x128xf32>
    %259 = vector.extract_strided_slice %258 {offsets = [0, 0], sizes = [8, 96], strides = [1, 1]} : vector<8x128xf32> to vector<8x96xf32>
    %260 = arith.negf %259 : vector<8x96xf32>
    %261 = math.exp %260 : vector<8x96xf32>
    %cst_51 = arith.constant 1.000000e+00 : f32
    %262 = vector.broadcast %cst_51 : f32 to vector<8x96xf32>
    %263 = arith.addf %262, %261 : vector<8x96xf32>
    %264 = arith.divf %262, %263 : vector<8x96xf32>
    %265 = vector.extract_strided_slice %258 {offsets = [0, 96], sizes = [8, 32], strides = [1, 1]} : vector<8x128xf32> to vector<8x32xf32>
    %266 = math.tanh %265 : vector<8x32xf32>
    %267 = vector.extract_strided_slice %264 {offsets = [0, 0], sizes = [8, 32], strides = [1, 1]} : vector<8x96xf32> to vector<8x32xf32>
    %268 = vector.extract_strided_slice %264 {offsets = [0, 32], sizes = [8, 32], strides = [1, 1]} : vector<8x96xf32> to vector<8x32xf32>
    %269 = vector.extract_strided_slice %264 {offsets = [0, 64], sizes = [8, 32], strides = [1, 1]} : vector<8x96xf32> to vector<8x32xf32>
    %270 = arith.mulf %268, %231 : vector<8x32xf32>
    %271 = arith.mulf %267, %266 : vector<8x32xf32>
    %272 = arith.addf %270, %271 : vector<8x32xf32>
    %273 = math.tanh %272 : vector<8x32xf32>
    %274 = arith.mulf %269, %273 : vector<8x32xf32>
    %c40 = arith.constant 40 : index
    %c0_52 = arith.constant 0 : index
    %275 = vector.load %arg10[%c40, %c0_52] : memref<64x32xf32, #tpu.memory_space<vmem>>, vector<8x32xf32>
    tpu.vector_store %arg10[%c40, %c0_52], %274 {strides = array<i32>} : memref<64x32xf32, #tpu.memory_space<vmem>>, vector<8x32xf32>,
    %cst_53 = arith.constant dense<0.000000e+00> : vector<8x128xf32>
    %276 = tpu.matmul %256, %2, %cst_53 {dimension_numbers = #tpu.dot_dimension_numbers<[1], [0], [0], [1], [0, 0, 1, 1], [], []>} : vector<8x32xf32>, vector<32x128xf32>, vector<8x128xf32> -> vector<8x128xf32>
    %277 = vector.broadcast %3 : vector<1x128xf32> to vector<8x128xf32>
    %278 = arith.addf %276, %277 : vector<8x128xf32>
    %279 = vector.extract_strided_slice %9 {offsets = [56, 0], sizes = [8, 128], strides = [1, 1]} : vector<64x128xf32> to vector<8x128xf32>
    %cst_54 = arith.constant dense<0.000000e+00> : vector<8x128xf32>
    %280 = tpu.matmul %256, %0, %cst_54 {dimension_numbers = #tpu.dot_dimension_numbers<[1], [0], [0], [1], [0, 0, 1, 1], [], []>} : vector<8x32xf32>, vector<32x128xf32>, vector<8x128xf32> -> vector<8x128xf32>
    %281 = arith.addf %279, %280 : vector<8x128xf32>
    %282 = vector.extract_strided_slice %281 {offsets = [0, 0], sizes = [8, 96], strides = [1, 1]} : vector<8x128xf32> to vector<8x96xf32>
    %283 = arith.negf %282 : vector<8x96xf32>
    %284 = math.exp %283 : vector<8x96xf32>
    %cst_55 = arith.constant 1.000000e+00 : f32
    %285 = vector.broadcast %cst_55 : f32 to vector<8x96xf32>
    %286 = arith.addf %285, %284 : vector<8x96xf32>
    %287 = arith.divf %285, %286 : vector<8x96xf32>
    %288 = vector.extract_strided_slice %281 {offsets = [0, 96], sizes = [8, 32], strides = [1, 1]} : vector<8x128xf32> to vector<8x32xf32>
    %289 = math.tanh %288 : vector<8x32xf32>
    %290 = vector.extract_strided_slice %287 {offsets = [0, 0], sizes = [8, 32], strides = [1, 1]} : vector<8x96xf32> to vector<8x32xf32>
    %291 = vector.extract_strided_slice %287 {offsets = [0, 32], sizes = [8, 32], strides = [1, 1]} : vector<8x96xf32> to vector<8x32xf32>
    %292 = vector.extract_strided_slice %287 {offsets = [0, 64], sizes = [8, 32], strides = [1, 1]} : vector<8x96xf32> to vector<8x32xf32>
    %293 = arith.mulf %291, %254 : vector<8x32xf32>
    %294 = arith.mulf %290, %289 : vector<8x32xf32>
    %295 = arith.addf %293, %294 : vector<8x32xf32>
    %296 = math.tanh %295 : vector<8x32xf32>
    %297 = arith.mulf %292, %296 : vector<8x32xf32>
    %cst_56 = arith.constant dense<0.000000e+00> : vector<8x128xf32>
    %298 = tpu.matmul %274, %1, %cst_56 {dimension_numbers = #tpu.dot_dimension_numbers<[1], [0], [0], [1], [0, 0, 1, 1], [], []>} : vector<8x32xf32>, vector<32x128xf32>, vector<8x128xf32> -> vector<8x128xf32>
    %299 = arith.addf %278, %298 : vector<8x128xf32>
    %300 = vector.extract_strided_slice %299 {offsets = [0, 0], sizes = [8, 96], strides = [1, 1]} : vector<8x128xf32> to vector<8x96xf32>
    %301 = arith.negf %300 : vector<8x96xf32>
    %302 = math.exp %301 : vector<8x96xf32>
    %cst_57 = arith.constant 1.000000e+00 : f32
    %303 = vector.broadcast %cst_57 : f32 to vector<8x96xf32>
    %304 = arith.addf %303, %302 : vector<8x96xf32>
    %305 = arith.divf %303, %304 : vector<8x96xf32>
    %306 = vector.extract_strided_slice %299 {offsets = [0, 96], sizes = [8, 32], strides = [1, 1]} : vector<8x128xf32> to vector<8x32xf32>
    %307 = math.tanh %306 : vector<8x32xf32>
    %308 = vector.extract_strided_slice %305 {offsets = [0, 0], sizes = [8, 32], strides = [1, 1]} : vector<8x96xf32> to vector<8x32xf32>
    %309 = vector.extract_strided_slice %305 {offsets = [0, 32], sizes = [8, 32], strides = [1, 1]} : vector<8x96xf32> to vector<8x32xf32>
    %310 = vector.extract_strided_slice %305 {offsets = [0, 64], sizes = [8, 32], strides = [1, 1]} : vector<8x96xf32> to vector<8x32xf32>
    %311 = arith.mulf %309, %272 : vector<8x32xf32>
    %312 = arith.mulf %308, %307 : vector<8x32xf32>
    %313 = arith.addf %311, %312 : vector<8x32xf32>
    %314 = math.tanh %313 : vector<8x32xf32>
    %315 = arith.mulf %310, %314 : vector<8x32xf32>
    %c48 = arith.constant 48 : index
    %c0_58 = arith.constant 0 : index
    %316 = vector.load %arg10[%c48, %c0_58] : memref<64x32xf32, #tpu.memory_space<vmem>>, vector<8x32xf32>
    tpu.vector_store %arg10[%c48, %c0_58], %315 {strides = array<i32>} : memref<64x32xf32, #tpu.memory_space<vmem>>, vector<8x32xf32>,
    %cst_59 = arith.constant dense<0.000000e+00> : vector<8x128xf32>
    %317 = tpu.matmul %297, %2, %cst_59 {dimension_numbers = #tpu.dot_dimension_numbers<[1], [0], [0], [1], [0, 0, 1, 1], [], []>} : vector<8x32xf32>, vector<32x128xf32>, vector<8x128xf32> -> vector<8x128xf32>
    %318 = vector.broadcast %3 : vector<1x128xf32> to vector<8x128xf32>
    %319 = arith.addf %317, %318 : vector<8x128xf32>
    %cst_60 = arith.constant dense<0.000000e+00> : vector<8x128xf32>
    %320 = tpu.matmul %315, %1, %cst_60 {dimension_numbers = #tpu.dot_dimension_numbers<[1], [0], [0], [1], [0, 0, 1, 1], [], []>} : vector<8x32xf32>, vector<32x128xf32>, vector<8x128xf32> -> vector<8x128xf32>
    %321 = arith.addf %319, %320 : vector<8x128xf32>
    %322 = vector.extract_strided_slice %321 {offsets = [0, 0], sizes = [8, 96], strides = [1, 1]} : vector<8x128xf32> to vector<8x96xf32>
    %323 = arith.negf %322 : vector<8x96xf32>
    %324 = math.exp %323 : vector<8x96xf32>
    %cst_61 = arith.constant 1.000000e+00 : f32
    %325 = vector.broadcast %cst_61 : f32 to vector<8x96xf32>
    %326 = arith.addf %325, %324 : vector<8x96xf32>
    %327 = arith.divf %325, %326 : vector<8x96xf32>
    %328 = vector.extract_strided_slice %321 {offsets = [0, 96], sizes = [8, 32], strides = [1, 1]} : vector<8x128xf32> to vector<8x32xf32>
    %329 = math.tanh %328 : vector<8x32xf32>
    %330 = vector.extract_strided_slice %327 {offsets = [0, 0], sizes = [8, 32], strides = [1, 1]} : vector<8x96xf32> to vector<8x32xf32>
    %331 = vector.extract_strided_slice %327 {offsets = [0, 32], sizes = [8, 32], strides = [1, 1]} : vector<8x96xf32> to vector<8x32xf32>
    %332 = vector.extract_strided_slice %327 {offsets = [0, 64], sizes = [8, 32], strides = [1, 1]} : vector<8x96xf32> to vector<8x32xf32>
    %333 = arith.mulf %331, %313 : vector<8x32xf32>
    %334 = arith.mulf %330, %329 : vector<8x32xf32>
    %335 = arith.addf %333, %334 : vector<8x32xf32>
    %336 = math.tanh %335 : vector<8x32xf32>
    %337 = arith.mulf %332, %336 : vector<8x32xf32>
    %c56 = arith.constant 56 : index
    %c0_62 = arith.constant 0 : index
    %338 = vector.load %arg10[%c56, %c0_62] : memref<64x32xf32, #tpu.memory_space<vmem>>, vector<8x32xf32>
    tpu.vector_store %arg10[%c56, %c0_62], %337 {strides = array<i32>} : memref<64x32xf32, #tpu.memory_space<vmem>>, vector<8x32xf32>,
    %c0_63 = arith.constant 0 : index
    %c0_64 = arith.constant 0 : index
    %339 = vector.load %arg10[%c0_63, %c0_64] : memref<64x32xf32, #tpu.memory_space<vmem>>, vector<64x32xf32>
    %c0_65 = arith.constant 0 : index
    %c0_66 = arith.constant 0 : index
    %340 = vector.load %arg7[%c0_65, %c0_66] : memref<32x128xf32, #tpu.memory_space<vmem>>, vector<32x128xf32>
    %cst_67 = arith.constant dense<0.000000e+00> : vector<64x128xf32>
    %341 = tpu.matmul %339, %340, %cst_67 {dimension_numbers = #tpu.dot_dimension_numbers<[1], [0], [0], [1], [0, 0, 1, 1], [], []>} : vector<64x32xf32>, vector<32x128xf32>, vector<64x128xf32> -> vector<64x128xf32>
    %c0_68 = arith.constant 0 : index
    %c0_69 = arith.constant 0 : index
    %342 = vector.load %arg8[%c0_68, %c0_69] : memref<1x128xf32, #tpu.memory_space<vmem>>, vector<1x128xf32>
    %343 = vector.broadcast %342 : vector<1x128xf32> to vector<64x128xf32>
    %344 = arith.addf %341, %343 : vector<64x128xf32>
    %c0_70 = arith.constant 0 : index
    %c0_71 = arith.constant 0 : index
    %345 = vector.load %arg9[%c0_70, %c0_71] : memref<64x128xf32, #tpu.memory_space<vmem>>, vector<64x128xf32>
    tpu.vector_store %arg9[%c0_70, %c0_71], %344 {strides = array<i32>} : memref<64x128xf32, #tpu.memory_space<vmem>>, vector<64x128xf32>,
    return
  }
}

</mosaic_0001>

<llo_original>
// kernel: tpu_custom_call.1
$region0: #{tpu_custom_call.1}
  #allocation0 [shape = 'u32[]', space=smem, size = 0x4, offset = 0x4, fixed_abs, tag = 'smem constant byte address 0x4 - core index']
  #allocation1 [shape = 'u32[144,128]{1,0:T(1,128)}', space=vmem, size = 0x12000, scoped, tag = 'internal scratch']
  #allocation2 [shape = 'f32[64,32]{1,0:T(8,128)}', space=vmem, size = 0x8000, scoped, tag = 'scratch operand']
  %s0 = inlined_call_operand.vmem [shape: f32[64,8], index: 0, kind: input, shape index: {}]
  %s1 = inlined_call_operand.vmem [shape: f32[8,128], index: 1, kind: input, shape index: {}]
  %s2 = inlined_call_operand.vmem [shape: f32[32,128], index: 2, kind: input, shape index: {}]
  %s3 = inlined_call_operand.vmem [shape: f32[1,128], index: 3, kind: input, shape index: {}]
  %s4 = inlined_call_operand.vmem [shape: f32[32,128], index: 4, kind: input, shape index: {}]
  %s5 = inlined_call_operand.hbm [shape: f32[32,128], index: 5, kind: input, shape index: {}]
  %s6 = inlined_call_operand.vmem [shape: f32[1,128], index: 6, kind: input, shape index: {}]
  %s7 = inlined_call_operand.hbm [shape: f32[32,128], index: 7, kind: input, shape index: {}]
  %s8 = inlined_call_operand.vmem [shape: f32[1,128], index: 8, kind: input, shape index: {}]
  %s9 = inlined_call_operand.hbm [shape: f32[64,128], index: 9, kind: output, shape index: {}]
  %s10 = sld [smem:[#allocation0]]
  $region54: #{tpu_custom_call.1} parent=0
    _
  %s12 = ssub.s32 1, %s10
  %s13 = scalar_select 0, %s12, %s10
  $region1: #{tpu_custom_call.1} parent=0
    #allocation3 [shape = 'u8[16384]{0}', space=vmem, size = 0x4000, scoped, tag = 'input window, operand 5, single buffered']
    #allocation4 [shape = 's32[1]{0}', space=sflag, size = 0x4, scoped, tag = 'scoped memory for tpu_custom_call.1']
    #allocation5 [shape = 's32[1]{0}', space=sflag, size = 0x4, scoped, tag = 'scoped memory for tpu_custom_call.1']
    #allocation6 [shape = 'u8[16384]{0}', space=vmem, size = 0x4000, scoped, tag = 'input window, operand 7, single buffered']
    #allocation7 [shape = 's32[1]{0}', space=sflag, size = 0x4, scoped, tag = 'scoped memory for tpu_custom_call.1']
    #allocation8 [shape = 'u8[32768]{0}', space=vmem, size = 0x8000, scoped, tag = 'output window, operand 0, single buffered']
    %14 = vsyncpa [#allocation4], 0
    %15 = vsyncpa [#allocation7], 0
    %16 = vsyncpa [#allocation5], 0
    // Predicated region
    $region2: #{tpu_custom_call.1} parent=1 // pred_check
      _
    $region3: #{tpu_custom_call.1} parent=1 // pred_check_branch
      %18 = sbr.rel (0) target = $region5
    $region4: #{tpu_custom_call.1} parent=1 // pred_region
      _
    $region5: #{tpu_custom_call.1} parent=1 // pred_fallthru
      _
    // Predicated region
    $region6: #{tpu_custom_call.1} parent=1 // pred_check
      _
    $region7: #{tpu_custom_call.1} parent=1 // pred_check_branch
      %20 = sbr.rel (0) target = $region9
    $region8: #{tpu_custom_call.1} parent=1 // pred_region
      _
    $region9: #{tpu_custom_call.1} parent=1 // pred_fallthru
      _
    // Predicated region
    $region10: #{tpu_custom_call.1} parent=1 // pred_check
      _
    $region11: #{tpu_custom_call.1} parent=1 // pred_check_branch
      %22 = sbr.rel (0) target = $region13
    $region12: #{tpu_custom_call.1} parent=1 // pred_region
      _
    $region13: #{tpu_custom_call.1} parent=1 // pred_fallthru
      _
    // Predicated region
    $region14: #{tpu_custom_call.1} parent=1 // pred_check
      _
    $region15: #{tpu_custom_call.1} parent=1 // pred_check_branch
      %24 = sbr.rel (0) target = $region17
    $region16: #{tpu_custom_call.1} parent=1 // pred_region
      _
    $region17: #{tpu_custom_call.1} parent=1 // pred_fallthru
      _
    // Predicated region
    $region18: #{tpu_custom_call.1} parent=1 // pred_check
      _
    $region19: #{tpu_custom_call.1} parent=1 // pred_check_branch
      %26 = sbr.rel (0) target = $region21
    $region20: #{tpu_custom_call.1} parent=1 // pred_region
      _
    $region21: #{tpu_custom_call.1} parent=1 // pred_fallthru
      _
    // Predicated region
    $region22: #{tpu_custom_call.1} parent=1 // pred_check
      _
    $region23: #{tpu_custom_call.1} parent=1 // pred_check_branch
      %28 = sbr.rel (0) target = $region25
    $region24: #{tpu_custom_call.1} parent=1 // pred_region
      %s30 = ssub.s32 512, 512
      %31 = vsyncadd [#allocation4], %s30
      %s32 = sshll.u32 [#allocation3], 4
      %s33 = int_to_ptr.vmem [resolvable:$true] %s32
      %38 = dma.hbm_to_vmem [thread:$0]  %s5, 512, %s33, [#allocation4], 128, 128, 8
    $region25: #{tpu_custom_call.1} parent=1 // pred_fallthru
      _
    // Predicated region
    $region26: #{tpu_custom_call.1} parent=1 // pred_check
      _
    $region27: #{tpu_custom_call.1} parent=1 // pred_check_branch
      %40 = sbr.rel (0) target = $region29
    $region28: #{tpu_custom_call.1} parent=1 // pred_region
      _
    $region29: #{tpu_custom_call.1} parent=1 // pred_fallthru
      _
    // Predicated region
    $region30: #{tpu_custom_call.1} parent=1 // pred_check
      _
    $region31: #{tpu_custom_call.1} parent=1 // pred_check_branch
      %42 = sbr.rel (0) target = $region33
    $region32: #{tpu_custom_call.1} parent=1 // pred_region
      %s44 = ssub.s32 512, 512
      %45 = vsyncadd [#allocation7], %s44
      %s46 = sshll.u32 [#allocation6], 4
      %s47 = int_to_ptr.vmem [resolvable:$true] %s46
      %52 = dma.hbm_to_vmem [thread:$0]  %s7, 512, %s47, [#allocation7], 128, 128, 8
    $region33: #{tpu_custom_call.1} parent=1 // pred_fallthru
      _
    // Predicated region
    $region34: #{tpu_custom_call.1} parent=1 // pred_check
      _
    $region35: #{tpu_custom_call.1} parent=1 // pred_check_branch
      %54 = sbr.rel (0) target = $region37
    $region36: #{tpu_custom_call.1} parent=1 // pred_region
      _
    $region37: #{tpu_custom_call.1} parent=1 // pred_fallthru
      _
    // Predicated region
    $region38: #{tpu_custom_call.1} parent=1 // pred_check
      _
    $region39: #{tpu_custom_call.1} parent=1 // pred_check_branch
      %56 = sbr.rel (0) target = $region41
    $region40: #{tpu_custom_call.1} parent=1 // pred_region
      %57 = dma.done [#allocation4], 512
    $region41: #{tpu_custom_call.1} parent=1 // pred_fallthru
      _
    // Predicated region
    $region42: #{tpu_custom_call.1} parent=1 // pred_check
      _
    $region43: #{tpu_custom_call.1} parent=1 // pred_check_branch
      %59 = sbr.rel (0) target = $region45
    $region44: #{tpu_custom_call.1} parent=1 // pred_region
      %60 = dma.done [#allocation7], 512
    $region45: #{tpu_custom_call.1} parent=1 // pred_fallthru
      _
    %v61 = vld [vmem:[%s2] sm:$0xff]
    %v62 = vld [vmem:[%s2 + $0x8] sm:$0xff]
    %v63 = vld [vmem:[%s2 + $0x10] sm:$0xff]
    %v64 = vld [vmem:[%s2 + $0x18] sm:$0xff]
    %v65 = vld [vmem:[#allocation3] sm:$0xff]
    %v66 = vld [vmem:[#allocation3 + $0x8] sm:$0xff]
    %v67 = vld [vmem:[#allocation3 + $0x10] sm:$0xff]
    %v68 = vld [vmem:[#allocation3 + $0x18] sm:$0xff]
    %v69 = vld [vmem:[%s4] sm:$0xff]
    %v70 = vld [vmem:[%s4 + $0x8] sm:$0xff]
    %v71 = vld [vmem:[%s4 + $0x10] sm:$0xff]
    %v72 = vld [vmem:[%s4 + $0x18] sm:$0xff]
    %v73 = vld [vmem:[%s6] sm:$0x1]
    %v74 = vld [vmem:[%s0] sm:$0xff]
    %v75 = vld [vmem:[%s0 + $0x8] sm:$0xff]
    %v76 = vld [vmem:[%s0 + $0x10] sm:$0xff]
    %v77 = vld [vmem:[%s0 + $0x18] sm:$0xff]
    %v78 = vld [vmem:[%s0 + $0x20] sm:$0xff]
    %v79 = vld [vmem:[%s0 + $0x28] sm:$0xff]
    %v80 = vld [vmem:[%s0 + $0x30] sm:$0xff]
    %v81 = vld [vmem:[%s0 + $0x38] sm:$0xff]
    %v82 = vld [vmem:[%s1] sm:$0xff]
    %v83 = vld [vmem:[%s3] sm:$0x1]
    %v85 = vlaneseq
    %v86 = vshrl.u32 %v85, 7
    %v87 = vsub.s32 0, %v86
    %v88 = vrot.slane %v83, %v87
    %vm90 = vcmask 64512
    %v92 = vsel %vm90, %v74, 0
    %v95 = vsel %vm90, %v75, 0
    %v98 = vsel %vm90, %v76, 0
    %v101 = vsel %vm90, %v77, 0
    %v104 = vsel %vm90, %v78, 0
    %v107 = vsel %vm90, %v79, 0
    %v110 = vsel %vm90, %v80, 0
    %v113 = vsel %vm90, %v81, 0
    %115 = vmatprep.subr.mxu0 0.0
    %116 = vmatpush1.msra.mxu0 0.0
    %117 = vmatprep.subr.mxu0 0.0
    %118 = vmatpush1.msra.mxu0 0.0
    %119 = vmatprep.subr.mxu0 0.0
    %120 = vmatpush1.msra.mxu0 0.0
    %121 = vmatprep.subr.mxu0 0.0
    %122 = vmatpush1.msra.mxu0 0.0
    %123 = vmatprep.subr.mxu0 0.0
    %124 = vmatpush1.msra.mxu0 0.0
    %125 = vmatprep.subr.mxu0 0.0
    %126 = vmatpush1.msra.mxu0 0.0
    %127 = vmatprep.subr.mxu0 0.0
    %128 = vmatpush1.msra.mxu0 0.0
    %129 = vmatprep.subr.mxu0 0.0
    %130 = vmatpush1.msra.mxu0 0.0
    %131 = vmatprep.subr.mxu0 0.0
    %132 = vmatpush1.msra.mxu0 0.0
    %133 = vmatprep.subr.mxu0 0.0
    %134 = vmatpush1.msra.mxu0 0.0
    %135 = vmatprep.subr.mxu0 0.0
    %136 = vmatpush1.msra.mxu0 0.0
    %137 = vmatprep.subr.mxu0 0.0
    %138 = vmatpush1.msra.mxu0 0.0
    %139 = vmatprep.subr.mxu0 0.0
    %140 = vmatpush1.msra.mxu0 0.0
    %141 = vmatprep.subr.mxu0 0.0
    %142 = vmatpush1.msra.mxu0 0.0
    %143 = vmatprep.subr.mxu0 0.0
    %144 = vmatpush1.msra.mxu0 0.0
    %145 = vmatprep.subr.mxu0 0.0
    %146 = vmatpush1.msra.mxu0 %v82
    %147 = vmatprep.subr.mxu0 0.0
    %148 = vmatpush2.msra.mxu0 0.0
    %149 = vmatprep.subr.mxu0 0.0
    %150 = vmatpush2.msra.mxu0 0.0
    %151 = vmatprep.subr.mxu0 0.0
    %152 = vmatpush2.msra.mxu0 0.0
    %153 = vmatprep.subr.mxu0 0.0
    %154 = vmatpush2.msra.mxu0 0.0
    %155 = vmatprep.subr.mxu0 0.0
    %156 = vmatpush2.msra.mxu0 0.0
    %157 = vmatprep.subr.mxu0 0.0
    %158 = vmatpush2.msra.mxu0 0.0
    %159 = vmatprep.subr.mxu0 0.0
    %160 = vmatpush2.msra.mxu0 0.0
    %161 = vmatprep.subr.mxu0 0.0
    %162 = vmatpush2.msra.mxu0 0.0
    %163 = vmatprep.subr.mxu0 0.0
    %164 = vmatpush2.msra.mxu0 0.0
    %165 = vmatprep.subr.mxu0 0.0
    %166 = vmatpush2.msra.mxu0 0.0
    %167 = vmatprep.subr.mxu0 0.0
    %168 = vmatpush2.msra.mxu0 0.0
    %169 = vmatprep.subr.mxu0 0.0
    %170 = vmatpush2.msra.mxu0 0.0
    %171 = vmatprep.subr.mxu0 0.0
    %172 = vmatpush2.msra.mxu0 0.0
    %173 = vmatprep.subr.mxu0 0.0
    %174 = vmatpush2.msra.mxu0 0.0
    %175 = vmatprep.subr.mxu0 0.0
    %176 = vmatpush2.msra.mxu0 0.0
    %177 = vmatprep.subr.mxu0 0.0
    %178 = vmatpush2.msra.mxu0 0.0
    %179 = vmatprep.mubr.f32.mxu0 0.0
    %180 = vmatmul.mubr.f32.gmra.mxu0 %v92
    %v181 = vpop.f32.mrf.mxu0
    %v182 = vadd.f32 %v88, %v181
    %v183 = vpop.f32.mrf.mxu0
    %184 = vmatprep.mubr.f32.mxu0 0.0
    %185 = vmatmul.mubr.f32.gmra.mxu0 %v95
    %v186 = vpop.f32.mrf.mxu0
    %v187 = vadd.f32 %v88, %v186
    %v188 = vpop.f32.mrf.mxu0
    %189 = vmatprep.mubr.f32.mxu0 0.0
    %190 = vmatmul.mubr.f32.gmra.mxu0 %v98
    %v191 = vpop.f32.mrf.mxu0
    %v192 = vadd.f32 %v88, %v191
    %v193 = vpop.f32.mrf.mxu0
    %194 = vmatprep.mubr.f32.mxu0 0.0
    %195 = vmatmul.mubr.f32.gmra.mxu0 %v101
    %v196 = vpop.f32.mrf.mxu0
    %v197 = vadd.f32 %v88, %v196
    %v198 = vpop.f32.mrf.mxu0
    %199 = vmatprep.mubr.f32.mxu0 0.0
    %200 = vmatmul.mubr.f32.gmra.mxu0 %v104
    %v201 = vpop.f32.mrf.mxu0
    %v202 = vadd.f32 %v88, %v201
    %v203 = vpop.f32.mrf.mxu0
    %204 = vmatprep.mubr.f32.mxu0 0.0
    %205 = vmatmul.mubr.f32.gmra.mxu0 %v107
    %v206 = vpop.f32.mrf.mxu0
    %v207 = vadd.f32 %v88, %v206
    %v208 = vpop.f32.mrf.mxu0
    %209 = vmatprep.mubr.f32.mxu0 0.0
    %210 = vmatmul.mubr.f32.gmra.mxu0 %v110
    %v211 = vpop.f32.mrf.mxu0
    %v212 = vadd.f32 %v88, %v211
    %v213 = vpop.f32.mrf.mxu0
    %214 = vmatprep.mubr.f32.mxu0 0.0
    %215 = vmatmul.mubr.f32.gmra.mxu0 %v113
    %v216 = vpop.f32.mrf.mxu0
    %v217 = vadd.f32 %v88, %v216
    %v218 = vpop.f32.mrf.mxu0
    %219 = vdwg.mxu0
    %vm220 = vcmask 261120
    %v222 = vsel %vm220, 0.0, 0
    %224 = vmatprep.subr.mxu0 0.0
    %225 = vmatpush1.msra.mxu0 0.0
    %226 = vmatprep.subr.mxu0 0.0
    %227 = vmatpush1.msra.mxu0 0.0
    %228 = vmatprep.subr.mxu0 0.0
    %229 = vmatpush1.msra.mxu0 0.0
    %230 = vmatprep.subr.mxu0 0.0
    %231 = vmatpush1.msra.mxu0 0.0
    %232 = vmatprep.subr.mxu0 0.0
    %233 = vmatpush1.msra.mxu0 0.0
    %234 = vmatprep.subr.mxu0 0.0
    %235 = vmatpush1.msra.mxu0 0.0
    %236 = vmatprep.subr.mxu0 0.0
    %237 = vmatpush1.msra.mxu0 0.0
    %238 = vmatprep.subr.mxu0 0.0
    %239 = vmatpush1.msra.mxu0 0.0
    %240 = vmatprep.subr.mxu0 0.0
    %241 = vmatpush1.msra.mxu0 0.0
    %242 = vmatprep.subr.mxu0 0.0
    %243 = vmatpush1.msra.mxu0 0.0
    %244 = vmatprep.subr.mxu0 0.0
    %245 = vmatpush1.msra.mxu0 0.0
    %246 = vmatprep.subr.mxu0 0.0
    %247 = vmatpush1.msra.mxu0 0.0
    %248 = vmatprep.subr.mxu0 0.0
    %249 = vmatpush1.msra.mxu0 %v64
    %250 = vmatprep.subr.mxu0 0.0
    %251 = vmatpush1.msra.mxu0 %v63
    %252 = vmatprep.subr.mxu0 0.0
    %253 = vmatpush1.msra.mxu0 %v62
    %254 = vmatprep.subr.mxu0 0.0
    %255 = vmatpush1.msra.mxu0 %v61
    %256 = vmatprep.subr.mxu0 0.0
    %257 = vmatpush2.msra.mxu0 0.0
    %258 = vmatprep.subr.mxu0 0.0
    %259 = vmatpush2.msra.mxu0 0.0
    %260 = vmatprep.subr.mxu0 0.0
    %261 = vmatpush2.msra.mxu0 0.0
    %262 = vmatprep.subr.mxu0 0.0
    %263 = vmatpush2.msra.mxu0 0.0
    %264 = vmatprep.subr.mxu0 0.0
    %265 = vmatpush2.msra.mxu0 0.0
    %266 = vmatprep.subr.mxu0 0.0
    %267 = vmatpush2.msra.mxu0 0.0
    %268 = vmatprep.subr.mxu0 0.0
    %269 = vmatpush2.msra.mxu0 0.0
    %270 = vmatprep.subr.mxu0 0.0
    %271 = vmatpush2.msra.mxu0 0.0
    %272 = vmatprep.subr.mxu0 0.0
    %273 = vmatpush2.msra.mxu0 0.0
    %274 = vmatprep.subr.mxu0 0.0
    %275 = vmatpush2.msra.mxu0 0.0
    %276 = vmatprep.subr.mxu0 0.0
    %277 = vmatpush2.msra.mxu0 0.0
    %278 = vmatprep.subr.mxu0 0.0
    %279 = vmatpush2.msra.mxu0 0.0
    %280 = vmatprep.subr.mxu0 0.0
    %281 = vmatpush2.msra.mxu0 0.0
    %282 = vmatprep.subr.mxu0 0.0
    %283 = vmatpush2.msra.mxu0 0.0
    %284 = vmatprep.subr.mxu0 0.0
    %285 = vmatpush2.msra.mxu0 0.0
    %286 = vmatprep.subr.mxu0 0.0
    %287 = vmatpush2.msra.mxu0 0.0
    %288 = vmatprep.mubr.f32.mxu0 0.0
    %289 = vmatmul.mubr.f32.gmra.mxu0 %v222
    %v290 = vpop.f32.mrf.mxu0
    %v291 = vadd.f32 0.0, %v290
    %v292 = vpop.f32.mrf.mxu0
    %293 = vdwg.mxu0
    %v294 = vadd.f32 %v182, %v291
    %v295 = vxor.u32 %v294, 2147483648
    %v296 = vmul.f32 %v295, 1.442695
    %v297 = vpow.pop %v296
    %v298 = vadd.f32 %v297, 1.0
    %v299 = vrcp.pop %v298
    %v300 = vmul.f32 1.0, %v299
    %v301 = vtanh.pop %v294
    %v302 = vmul.f32 %v300, 0.0
    %304 = vrot.lane.b32.xlu0 %v301, 32
    %v305 = vpop.permute.xlu0 %304
    %v307 = vmul.f32 %v300, %v305
    %309 = vrot.lane.b32.xlu0 %v307, 32
    %v310 = vpop.permute.xlu0 %309
    %v312 = vadd.f32 %v302, %v310
    %v313 = vtanh.pop %v312
    %315 = vrot.lane.b32.xlu0 %v313, 32
    %v316 = vpop.permute.xlu0 %315
    %v318 = vmul.f32 %v300, %v316
    %v320 = vlaneseq
    %v321 = vshrl.u32 %v320, 7
    %v322 = vsub.s32 0, %v321
    %v323 = vrot.slane %v73, %v322
    %326 = vrot.lane.b32.xlu0 %v318, 64
    %v327 = vpop.permute.xlu0 %326
    %v328 = vsel %vm220, %v327, 0
    %330 = vmatprep.subr.mxu0 0.0
    %331 = vmatpush1.msra.mxu0 0.0
    %332 = vmatprep.subr.mxu0 0.0
    %333 = vmatpush1.msra.mxu0 0.0
    %334 = vmatprep.subr.mxu0 0.0
    %335 = vmatpush1.msra.mxu0 0.0
    %336 = vmatprep.subr.mxu0 0.0
    %337 = vmatpush1.msra.mxu0 0.0
    %338 = vmatprep.subr.mxu0 0.0
    %339 = vmatpush1.msra.mxu0 0.0
    %340 = vmatprep.subr.mxu0 0.0
    %341 = vmatpush1.msra.mxu0 0.0
    %342 = vmatprep.subr.mxu0 0.0
    %343 = vmatpush1.msra.mxu0 0.0
    %344 = vmatprep.subr.mxu0 0.0
    %345 = vmatpush1.msra.mxu0 0.0
    %346 = vmatprep.subr.mxu0 0.0
    %347 = vmatpush1.msra.mxu0 0.0
    %348 = vmatprep.subr.mxu0 0.0
    %349 = vmatpush1.msra.mxu0 0.0
    %350 = vmatprep.subr.mxu0 0.0
    %351 = vmatpush1.msra.mxu0 0.0
    %352 = vmatprep.subr.mxu0 0.0
    %353 = vmatpush1.msra.mxu0 0.0
    %354 = vmatprep.subr.mxu0 0.0
    %355 = vmatpush1.msra.mxu0 %v72
    %356 = vmatprep.subr.mxu0 0.0
    %357 = vmatpush1.msra.mxu0 %v71
    %358 = vmatprep.subr.mxu0 0.0
    %359 = vmatpush1.msra.mxu0 %v70
    %360 = vmatprep.subr.mxu0 0.0
    %361 = vmatpush1.msra.mxu0 %v69
    %362 = vmatprep.subr.mxu0 0.0
    %363 = vmatpush2.msra.mxu0 0.0
    %364 = vmatprep.subr.mxu0 0.0
    %365 = vmatpush2.msra.mxu0 0.0
    %366 = vmatprep.subr.mxu0 0.0
    %367 = vmatpush2.msra.mxu0 0.0
    %368 = vmatprep.subr.mxu0 0.0
    %369 = vmatpush2.msra.mxu0 0.0
    %370 = vmatprep.subr.mxu0 0.0
    %371 = vmatpush2.msra.mxu0 0.0
    %372 = vmatprep.subr.mxu0 0.0
    %373 = vmatpush2.msra.mxu0 0.0
    %374 = vmatprep.subr.mxu0 0.0
    %375 = vmatpush2.msra.mxu0 0.0
    %376 = vmatprep.subr.mxu0 0.0
    %377 = vmatpush2.msra.mxu0 0.0
    %378 = vmatprep.subr.mxu0 0.0
    %379 = vmatpush2.msra.mxu0 0.0
    %380 = vmatprep.subr.mxu0 0.0
    %381 = vmatpush2.msra.mxu0 0.0
    %382 = vmatprep.subr.mxu0 0.0
    %383 = vmatpush2.msra.mxu0 0.0
    %384 = vmatprep.subr.mxu0 0.0
    %385 = vmatpush2.msra.mxu0 0.0
    %386 = vmatprep.subr.mxu0 0.0
    %387 = vmatpush2.msra.mxu0 0.0
    %388 = vmatprep.subr.mxu0 0.0
    %389 = vmatpush2.msra.mxu0 0.0
    %390 = vmatprep.subr.mxu0 0.0
    %391 = vmatpush2.msra.mxu0 0.0
    %392 = vmatprep.subr.mxu0 0.0
    %393 = vmatpush2.msra.mxu0 0.0
    %394 = vmatprep.mubr.f32.mxu0 0.0
    %395 = vmatmul.mubr.f32.gmra.mxu0 %v328
    %v396 = vpop.f32.mrf.mxu0
    %v397 = vadd.f32 %v323, %v396
    %v398 = vpop.f32.mrf.mxu0
    %399 = vdwg.mxu0
    %400 = vmatprep.subr.mxu0 0.0
    %401 = vmatpush1.msra.mxu0 0.0
    %402 = vmatprep.subr.mxu0 0.0
    %403 = vmatpush1.msra.mxu0 0.0
    %404 = vmatprep.subr.mxu0 0.0
    %405 = vmatpush1.msra.mxu0 0.0
    %406 = vmatprep.subr.mxu0 0.0
    %407 = vmatpush1.msra.mxu0 0.0
    %408 = vmatprep.subr.mxu0 0.0
    %409 = vmatpush1.msra.mxu0 0.0
    %410 = vmatprep.subr.mxu0 0.0
    %411 = vmatpush1.msra.mxu0 0.0
    %412 = vmatprep.subr.mxu0 0.0
    %413 = vmatpush1.msra.mxu0 0.0
    %414 = vmatprep.subr.mxu0 0.0
    %415 = vmatpush1.msra.mxu0 0.0
    %416 = vmatprep.subr.mxu0 0.0
    %417 = vmatpush1.msra.mxu0 0.0
    %418 = vmatprep.subr.mxu0 0.0
    %419 = vmatpush1.msra.mxu0 0.0
    %420 = vmatprep.subr.mxu0 0.0
    %421 = vmatpush1.msra.mxu0 0.0
    %422 = vmatprep.subr.mxu0 0.0
    %423 = vmatpush1.msra.mxu0 0.0
    %424 = vmatprep.subr.mxu0 0.0
    %425 = vmatpush1.msra.mxu0 %v64
    %426 = vmatprep.subr.mxu0 0.0
    %427 = vmatpush1.msra.mxu0 %v63
    %428 = vmatprep.subr.mxu0 0.0
    %429 = vmatpush1.msra.mxu0 %v62
    %430 = vmatprep.subr.mxu0 0.0
    %431 = vmatpush1.msra.mxu0 %v61
    %432 = vmatprep.subr.mxu0 0.0
    %433 = vmatpush2.msra.mxu0 0.0
    %434 = vmatprep.subr.mxu0 0.0
    %435 = vmatpush2.msra.mxu0 0.0
    %436 = vmatprep.subr.mxu0 0.0
    %437 = vmatpush2.msra.mxu0 0.0
    %438 = vmatprep.subr.mxu0 0.0
    %439 = vmatpush2.msra.mxu0 0.0
    %440 = vmatprep.subr.mxu0 0.0
    %441 = vmatpush2.msra.mxu0 0.0
    %442 = vmatprep.subr.mxu0 0.0
    %443 = vmatpush2.msra.mxu0 0.0
    %444 = vmatprep.subr.mxu0 0.0
    %445 = vmatpush2.msra.mxu0 0.0
    %446 = vmatprep.subr.mxu0 0.0
    %447 = vmatpush2.msra.mxu0 0.0
    %448 = vmatprep.subr.mxu0 0.0
    %449 = vmatpush2.msra.mxu0 0.0
    %450 = vmatprep.subr.mxu0 0.0
    %451 = vmatpush2.msra.mxu0 0.0
    %452 = vmatprep.subr.mxu0 0.0
    %453 = vmatpush2.msra.mxu0 0.0
    %454 = vmatprep.subr.mxu0 0.0
    %455 = vmatpush2.msra.mxu0 0.0
    %456 = vmatprep.subr.mxu0 0.0
    %457 = vmatpush2.msra.mxu0 0.0
    %458 = vmatprep.subr.mxu0 0.0
    %459 = vmatpush2.msra.mxu0 0.0
    %460 = vmatprep.subr.mxu0 0.0
    %461 = vmatpush2.msra.mxu0 0.0
    %462 = vmatprep.subr.mxu0 0.0
    %463 = vmatpush2.msra.mxu0 0.0
    %464 = vmatprep.mubr.f32.mxu0 0.0
    %465 = vmatmul.mubr.f32.gmra.mxu0 %v328
    %v466 = vpop.f32.mrf.mxu0
    %v467 = vadd.f32 0.0, %v466
    %v468 = vpop.f32.mrf.mxu0
    %469 = vdwg.mxu0
    %v470 = vadd.f32 %v187, %v467
    %v471 = vxor.u32 %v470, 2147483648
    %v472 = vmul.f32 %v471, 1.442695
    %v473 = vpow.pop %v472
    %v474 = vadd.f32 %v473, 1.0
    %v475 = vrcp.pop %v474
    %v476 = vmul.f32 1.0, %v475
    %v477 = vtanh.pop %v470
    %v478 = vmul.f32 %v476, %v312
    %480 = vrot.lane.b32.xlu0 %v477, 32
    %v481 = vpop.permute.xlu0 %480
    %v483 = vmul.f32 %v476, %v481
    %485 = vrot.lane.b32.xlu0 %v483, 32
    %v486 = vpop.permute.xlu0 %485
    %v488 = vadd.f32 %v478, %v486
    %v489 = vtanh.pop %v488
    %491 = vrot.lane.b32.xlu0 %v489, 32
    %v492 = vpop.permute.xlu0 %491
    %v494 = vmul.f32 %v476, %v492
    %495 = vmatprep.subr.mxu0 0.0
    %496 = vmatpush1.msra.mxu0 0.0
    %497 = vmatprep.subr.mxu0 0.0
    %498 = vmatpush1.msra.mxu0 0.0
    %499 = vmatprep.subr.mxu0 0.0
    %500 = vmatpush1.msra.mxu0 0.0
    %501 = vmatprep.subr.mxu0 0.0
    %502 = vmatpush1.msra.mxu0 0.0
    %503 = vmatprep.subr.mxu0 0.0
    %504 = vmatpush1.msra.mxu0 0.0
    %505 = vmatprep.subr.mxu0 0.0
    %506 = vmatpush1.msra.mxu0 0.0
    %507 = vmatprep.subr.mxu0 0.0
    %508 = vmatpush1.msra.mxu0 0.0
    %509 = vmatprep.subr.mxu0 0.0
    %510 = vmatpush1.msra.mxu0 0.0
    %511 = vmatprep.subr.mxu0 0.0
    %512 = vmatpush1.msra.mxu0 0.0
    %513 = vmatprep.subr.mxu0 0.0
    %514 = vmatpush1.msra.mxu0 0.0
    %515 = vmatprep.subr.mxu0 0.0
    %516 = vmatpush1.msra.mxu0 0.0
    %517 = vmatprep.subr.mxu0 0.0
    %518 = vmatpush1.msra.mxu0 0.0
    %519 = vmatprep.subr.mxu0 0.0
    %520 = vmatpush1.msra.mxu0 %v68
    %521 = vmatprep.subr.mxu0 0.0
    %522 = vmatpush1.msra.mxu0 %v67
    %523 = vmatprep.subr.mxu0 0.0
    %524 = vmatpush1.msra.mxu0 %v66
    %525 = vmatprep.subr.mxu0 0.0
    %526 = vmatpush1.msra.mxu0 %v65
    %527 = vmatprep.subr.mxu0 0.0
    %528 = vmatpush2.msra.mxu0 0.0
    %529 = vmatprep.subr.mxu0 0.0
    %530 = vmatpush2.msra.mxu0 0.0
    %531 = vmatprep.subr.mxu0 0.0
    %532 = vmatpush2.msra.mxu0 0.0
    %533 = vmatprep.subr.mxu0 0.0
    %534 = vmatpush2.msra.mxu0 0.0
    %535 = vmatprep.subr.mxu0 0.0
    %536 = vmatpush2.msra.mxu0 0.0
    %537 = vmatprep.subr.mxu0 0.0
    %538 = vmatpush2.msra.mxu0 0.0
    %539 = vmatprep.subr.mxu0 0.0
    %540 = vmatpush2.msra.mxu0 0.0
    %541 = vmatprep.subr.mxu0 0.0
    %542 = vmatpush2.msra.mxu0 0.0
    %543 = vmatprep.subr.mxu0 0.0
    %544 = vmatpush2.msra.mxu0 0.0
    %545 = vmatprep.subr.mxu0 0.0
    %546 = vmatpush2.msra.mxu0 0.0
    %547 = vmatprep.subr.mxu0 0.0
    %548 = vmatpush2.msra.mxu0 0.0
    %549 = vmatprep.subr.mxu0 0.0
    %550 = vmatpush2.msra.mxu0 0.0
    %551 = vmatprep.subr.mxu0 0.0
    %552 = vmatpush2.msra.mxu0 0.0
    %553 = vmatprep.subr.mxu0 0.0
    %554 = vmatpush2.msra.mxu0 0.0
    %555 = vmatprep.subr.mxu0 0.0
    %556 = vmatpush2.msra.mxu0 0.0
    %557 = vmatprep.subr.mxu0 0.0
    %558 = vmatpush2.msra.mxu0 0.0
    %559 = vmatprep.mubr.f32.mxu0 0.0
    %560 = vmatmul.mubr.f32.gmra.mxu0 %v222
    %v561 = vpop.f32.mrf.mxu0
    %v562 = vadd.f32 0.0, %v561
    %v563 = vpop.f32.mrf.mxu0
    %564 = vdwg.mxu0
    %v565 = vadd.f32 %v397, %v562
    %v566 = vxor.u32 %v565, 2147483648
    %v567 = vmul.f32 %v566, 1.442695
    %v568 = vpow.pop %v567
    %v569 = vadd.f32 %v568, 1.0
    %v570 = vrcp.pop %v569
    %v571 = vmul.f32 1.0, %v570
    %v572 = vtanh.pop %v565
    %v573 = vmul.f32 %v571, 0.0
    %575 = vrot.lane.b32.xlu0 %v572, 32
    %v576 = vpop.permute.xlu0 %575
    %v578 = vmul.f32 %v571, %v576
    %580 = vrot.lane.b32.xlu0 %v578, 32
    %v581 = vpop.permute.xlu0 %580
    %v583 = vadd.f32 %v573, %v581
    %v584 = vtanh.pop %v583
    %586 = vrot.lane.b32.xlu0 %v584, 32
    %v587 = vpop.permute.xlu0 %586
    %v589 = vmul.f32 %v571, %v587
    %591 = vrot.lane.b32.xlu0 %v589, 64
    %v592 = vpop.permute.xlu0 %591
    %594 = vst.msk [vmem:[#allocation2] sm:$0xff] %vm220, %v592
    %596 = vrot.lane.b32.xlu0 %v494, 64
    %v597 = vpop.permute.xlu0 %596
    %v598 = vsel %vm220, %v597, 0
    %600 = vmatprep.subr.mxu0 0.0
    %601 = vmatpush1.msra.mxu0 0.0
    %602 = vmatprep.subr.mxu0 0.0
    %603 = vmatpush1.msra.mxu0 0.0
    %604 = vmatprep.subr.mxu0 0.0
    %605 = vmatpush1.msra.mxu0 0.0
    %606 = vmatprep.subr.mxu0 0.0
    %607 = vmatpush1.msra.mxu0 0.0
    %608 = vmatprep.subr.mxu0 0.0
    %609 = vmatpush1.msra.mxu0 0.0
    %610 = vmatprep.subr.mxu0 0.0
    %611 = vmatpush1.msra.mxu0 0.0
    %612 = vmatprep.subr.mxu0 0.0
    %613 = vmatpush1.msra.mxu0 0.0
    %614 = vmatprep.subr.mxu0 0.0
    %615 = vmatpush1.msra.mxu0 0.0
    %616 = vmatprep.subr.mxu0 0.0
    %617 = vmatpush1.msra.mxu0 0.0
    %618 = vmatprep.subr.mxu0 0.0
    %619 = vmatpush1.msra.mxu0 0.0
    %620 = vmatprep.subr.mxu0 0.0
    %621 = vmatpush1.msra.mxu0 0.0
    %622 = vmatprep.subr.mxu0 0.0
    %623 = vmatpush1.msra.mxu0 0.0
    %624 = vmatprep.subr.mxu0 0.0
    %625 = vmatpush1.msra.mxu0 %v72
    %626 = vmatprep.subr.mxu0 0.0
    %627 = vmatpush1.msra.mxu0 %v71
    %628 = vmatprep.subr.mxu0 0.0
    %629 = vmatpush1.msra.mxu0 %v70
    %630 = vmatprep.subr.mxu0 0.0
    %631 = vmatpush1.msra.mxu0 %v69
    %632 = vmatprep.subr.mxu0 0.0
    %633 = vmatpush2.msra.mxu0 0.0
    %634 = vmatprep.subr.mxu0 0.0
    %635 = vmatpush2.msra.mxu0 0.0
    %636 = vmatprep.subr.mxu0 0.0
    %637 = vmatpush2.msra.mxu0 0.0
    %638 = vmatprep.subr.mxu0 0.0
    %639 = vmatpush2.msra.mxu0 0.0
    %640 = vmatprep.subr.mxu0 0.0
    %641 = vmatpush2.msra.mxu0 0.0
    %642 = vmatprep.subr.mxu0 0.0
    %643 = vmatpush2.msra.mxu0 0.0
    %644 = vmatprep.subr.mxu0 0.0
    %645 = vmatpush2.msra.mxu0 0.0
    %646 = vmatprep.subr.mxu0 0.0
    %647 = vmatpush2.msra.mxu0 0.0
    %648 = vmatprep.subr.mxu0 0.0
    %649 = vmatpush2.msra.mxu0 0.0
    %650 = vmatprep.subr.mxu0 0.0
    %651 = vmatpush2.msra.mxu0 0.0
    %652 = vmatprep.subr.mxu0 0.0
    %653 = vmatpush2.msra.mxu0 0.0
    %654 = vmatprep.subr.mxu0 0.0
    %655 = vmatpush2.msra.mxu0 0.0
    %656 = vmatprep.subr.mxu0 0.0
    %657 = vmatpush2.msra.mxu0 0.0
    %658 = vmatprep.subr.mxu0 0.0
    %659 = vmatpush2.msra.mxu0 0.0
    %660 = vmatprep.subr.mxu0 0.0
    %661 = vmatpush2.msra.mxu0 0.0
    %662 = vmatprep.subr.mxu0 0.0
    %663 = vmatpush2.msra.mxu0 0.0
    %664 = vmatprep.mubr.f32.mxu0 0.0
    %665 = vmatmul.mubr.f32.gmra.mxu0 %v598
    %v666 = vpop.f32.mrf.mxu0
    %v667 = vadd.f32 %v323, %v666
    %v668 = vpop.f32.mrf.mxu0
    %669 = vdwg.mxu0
    %670 = vmatprep.subr.mxu0 0.0
    %671 = vmatpush1.msra.mxu0 0.0
    %672 = vmatprep.subr.mxu0 0.0
    %673 = vmatpush1.msra.mxu0 0.0
    %674 = vmatprep.subr.mxu0 0.0
    %675 = vmatpush1.msra.mxu0 0.0
    %676 = vmatprep.subr.mxu0 0.0
    %677 = vmatpush1.msra.mxu0 0.0
    %678 = vmatprep.subr.mxu0 0.0
    %679 = vmatpush1.msra.mxu0 0.0
    %680 = vmatprep.subr.mxu0 0.0
    %681 = vmatpush1.msra.mxu0 0.0
    %682 = vmatprep.subr.mxu0 0.0
    %683 = vmatpush1.msra.mxu0 0.0
    %684 = vmatprep.subr.mxu0 0.0
    %685 = vmatpush1.msra.mxu0 0.0
    %686 = vmatprep.subr.mxu0 0.0
    %687 = vmatpush1.msra.mxu0 0.0
    %688 = vmatprep.subr.mxu0 0.0
    %689 = vmatpush1.msra.mxu0 0.0
    %690 = vmatprep.subr.mxu0 0.0
    %691 = vmatpush1.msra.mxu0 0.0
    %692 = vmatprep.subr.mxu0 0.0
    %693 = vmatpush1.msra.mxu0 0.0
    %694 = vmatprep.subr.mxu0 0.0
    %695 = vmatpush1.msra.mxu0 %v64
    %696 = vmatprep.subr.mxu0 0.0
    %697 = vmatpush1.msra.mxu0 %v63
    %698 = vmatprep.subr.mxu0 0.0
    %699 = vmatpush1.msra.mxu0 %v62
    %700 = vmatprep.subr.mxu0 0.0
    %701 = vmatpush1.msra.mxu0 %v61
    %702 = vmatprep.subr.mxu0 0.0
    %703 = vmatpush2.msra.mxu0 0.0
    %704 = vmatprep.subr.mxu0 0.0
    %705 = vmatpush2.msra.mxu0 0.0
    %706 = vmatprep.subr.mxu0 0.0
    %707 = vmatpush2.msra.mxu0 0.0
    %708 = vmatprep.subr.mxu0 0.0
    %709 = vmatpush2.msra.mxu0 0.0
    %710 = vmatprep.subr.mxu0 0.0
    %711 = vmatpush2.msra.mxu0 0.0
    %712 = vmatprep.subr.mxu0 0.0
    %713 = vmatpush2.msra.mxu0 0.0
    %714 = vmatprep.subr.mxu0 0.0
    %715 = vmatpush2.msra.mxu0 0.0
    %716 = vmatprep.subr.mxu0 0.0
    %717 = vmatpush2.msra.mxu0 0.0
    %718 = vmatprep.subr.mxu0 0.0
    %719 = vmatpush2.msra.mxu0 0.0
    %720 = vmatprep.subr.mxu0 0.0
    %721 = vmatpush2.msra.mxu0 0.0
    %722 = vmatprep.subr.mxu0 0.0
    %723 = vmatpush2.msra.mxu0 0.0
    %724 = vmatprep.subr.mxu0 0.0
    %725 = vmatpush2.msra.mxu0 0.0
    %726 = vmatprep.subr.mxu0 0.0
    %727 = vmatpush2.msra.mxu0 0.0
    %728 = vmatprep.subr.mxu0 0.0
    %729 = vmatpush2.msra.mxu0 0.0
    %730 = vmatprep.subr.mxu0 0.0
    %731 = vmatpush2.msra.mxu0 0.0
    %732 = vmatprep.subr.mxu0 0.0
    %733 = vmatpush2.msra.mxu0 0.0
    %734 = vmatprep.mubr.f32.mxu0 0.0
    %735 = vmatmul.mubr.f32.gmra.mxu0 %v598
    %v736 = vpop.f32.mrf.mxu0
    %v737 = vadd.f32 0.0, %v736
    %v738 = vpop.f32.mrf.mxu0
    %739 = vdwg.mxu0
    %v740 = vadd.f32 %v192, %v737
    %v741 = vxor.u32 %v740, 2147483648
    %v742 = vmul.f32 %v741, 1.442695
    %v743 = vpow.pop %v742
    %v744 = vadd.f32 %v743, 1.0
    %v745 = vrcp.pop %v744
    %v746 = vmul.f32 1.0, %v745
    %v747 = vtanh.pop %v740
    %v748 = vmul.f32 %v746, %v488
    %750 = vrot.lane.b32.xlu0 %v747, 32
    %v751 = vpop.permute.xlu0 %750
    %v753 = vmul.f32 %v746, %v751
    %755 = vrot.lane.b32.xlu0 %v753, 32
    %v756 = vpop.permute.xlu0 %755
    %v758 = vadd.f32 %v748, %v756
    %v759 = vtanh.pop %v758
    %761 = vrot.lane.b32.xlu0 %v759, 32
    %v762 = vpop.permute.xlu0 %761
    %v764 = vmul.f32 %v746, %v762
    %v765 = vsel %vm220, %v592, 0
    %767 = vmatprep.subr.mxu0 0.0
    %768 = vmatpush1.msra.mxu0 0.0
    %769 = vmatprep.subr.mxu0 0.0
    %770 = vmatpush1.msra.mxu0 0.0
    %771 = vmatprep.subr.mxu0 0.0
    %772 = vmatpush1.msra.mxu0 0.0
    %773 = vmatprep.subr.mxu0 0.0
    %774 = vmatpush1.msra.mxu0 0.0
    %775 = vmatprep.subr.mxu0 0.0
    %776 = vmatpush1.msra.mxu0 0.0
    %777 = vmatprep.subr.mxu0 0.0
    %778 = vmatpush1.msra.mxu0 0.0
    %779 = vmatprep.subr.mxu0 0.0
    %780 = vmatpush1.msra.mxu0 0.0
    %781 = vmatprep.subr.mxu0 0.0
    %782 = vmatpush1.msra.mxu0 0.0
    %783 = vmatprep.subr.mxu0 0.0
    %784 = vmatpush1.msra.mxu0 0.0
    %785 = vmatprep.subr.mxu0 0.0
    %786 = vmatpush1.msra.mxu0 0.0
    %787 = vmatprep.subr.mxu0 0.0
    %788 = vmatpush1.msra.mxu0 0.0
    %789 = vmatprep.subr.mxu0 0.0
    %790 = vmatpush1.msra.mxu0 0.0
    %791 = vmatprep.subr.mxu0 0.0
    %792 = vmatpush1.msra.mxu0 %v68
    %793 = vmatprep.subr.mxu0 0.0
    %794 = vmatpush1.msra.mxu0 %v67
    %795 = vmatprep.subr.mxu0 0.0
    %796 = vmatpush1.msra.mxu0 %v66
    %797 = vmatprep.subr.mxu0 0.0
    %798 = vmatpush1.msra.mxu0 %v65
    %799 = vmatprep.subr.mxu0 0.0
    %800 = vmatpush2.msra.mxu0 0.0
    %801 = vmatprep.subr.mxu0 0.0
    %802 = vmatpush2.msra.mxu0 0.0
    %803 = vmatprep.subr.mxu0 0.0
    %804 = vmatpush2.msra.mxu0 0.0
    %805 = vmatprep.subr.mxu0 0.0
    %806 = vmatpush2.msra.mxu0 0.0
    %807 = vmatprep.subr.mxu0 0.0
    %808 = vmatpush2.msra.mxu0 0.0
    %809 = vmatprep.subr.mxu0 0.0
    %810 = vmatpush2.msra.mxu0 0.0
    %811 = vmatprep.subr.mxu0 0.0
    %812 = vmatpush2.msra.mxu0 0.0
    %813 = vmatprep.subr.mxu0 0.0
    %814 = vmatpush2.msra.mxu0 0.0
    %815 = vmatprep.subr.mxu0 0.0
    %816 = vmatpush2.msra.mxu0 0.0
    %817 = vmatprep.subr.mxu0 0.0
    %818 = vmatpush2.msra.mxu0 0.0
    %819 = vmatprep.subr.mxu0 0.0
    %820 = vmatpush2.msra.mxu0 0.0
    %821 = vmatprep.subr.mxu0 0.0
    %822 = vmatpush2.msra.mxu0 0.0
    %823 = vmatprep.subr.mxu0 0.0
    %824 = vmatpush2.msra.mxu0 0.0
    %825 = vmatprep.subr.mxu0 0.0
    %826 = vmatpush2.msra.mxu0 0.0
    %827 = vmatprep.subr.mxu0 0.0
    %828 = vmatpush2.msra.mxu0 0.0
    %829 = vmatprep.subr.mxu0 0.0
    %830 = vmatpush2.msra.mxu0 0.0
    %831 = vmatprep.mubr.f32.mxu0 0.0
    %832 = vmatmul.mubr.f32.gmra.mxu0 %v765
    %v833 = vpop.f32.mrf.mxu0
    %v834 = vadd.f32 0.0, %v833
    %v835 = vpop.f32.mrf.mxu0
    %836 = vdwg.mxu0
    %v837 = vadd.f32 %v667, %v834
    %v838 = vxor.u32 %v837, 2147483648
    %v839 = vmul.f32 %v838, 1.442695
    %v840 = vpow.pop %v839
    %v841 = vadd.f32 %v840, 1.0
    %v842 = vrcp.pop %v841
    %v843 = vmul.f32 1.0, %v842
    %v844 = vtanh.pop %v837
    %v845 = vmul.f32 %v843, %v583
    %847 = vrot.lane.b32.xlu0 %v844, 32
    %v848 = vpop.permute.xlu0 %847
    %v850 = vmul.f32 %v843, %v848
    %852 = vrot.lane.b32.xlu0 %v850, 32
    %v853 = vpop.permute.xlu0 %852
    %v855 = vadd.f32 %v845, %v853
    %v856 = vtanh.pop %v855
    %858 = vrot.lane.b32.xlu0 %v856, 32
    %v859 = vpop.permute.xlu0 %858
    %v861 = vmul.f32 %v843, %v859
    %863 = vrot.lane.b32.xlu0 %v861, 64
    %v864 = vpop.permute.xlu0 %863
    %866 = vst.msk [vmem:[#allocation2 + $0x8] sm:$0xff] %vm220, %v864
    %868 = vrot.lane.b32.xlu0 %v764, 64
    %v869 = vpop.permute.xlu0 %868
    %v870 = vsel %vm220, %v869, 0
    %872 = vmatprep.subr.mxu0 0.0
    %873 = vmatpush1.msra.mxu0 0.0
    %874 = vmatprep.subr.mxu0 0.0
    %875 = vmatpush1.msra.mxu0 0.0
    %876 = vmatprep.subr.mxu0 0.0
    %877 = vmatpush1.msra.mxu0 0.0
    %878 = vmatprep.subr.mxu0 0.0
    %879 = vmatpush1.msra.mxu0 0.0
    %880 = vmatprep.subr.mxu0 0.0
    %881 = vmatpush1.msra.mxu0 0.0
    %882 = vmatprep.subr.mxu0 0.0
    %883 = vmatpush1.msra.mxu0 0.0
    %884 = vmatprep.subr.mxu0 0.0
    %885 = vmatpush1.msra.mxu0 0.0
    %886 = vmatprep.subr.mxu0 0.0
    %887 = vmatpush1.msra.mxu0 0.0
    %888 = vmatprep.subr.mxu0 0.0
    %889 = vmatpush1.msra.mxu0 0.0
    %890 = vmatprep.subr.mxu0 0.0
    %891 = vmatpush1.msra.mxu0 0.0
    %892 = vmatprep.subr.mxu0 0.0
    %893 = vmatpush1.msra.mxu0 0.0
    %894 = vmatprep.subr.mxu0 0.0
    %895 = vmatpush1.msra.mxu0 0.0
    %896 = vmatprep.subr.mxu0 0.0
    %897 = vmatpush1.msra.mxu0 %v72
    %898 = vmatprep.subr.mxu0 0.0
    %899 = vmatpush1.msra.mxu0 %v71
    %900 = vmatprep.subr.mxu0 0.0
    %901 = vmatpush1.msra.mxu0 %v70
    %902 = vmatprep.subr.mxu0 0.0
    %903 = vmatpush1.msra.mxu0 %v69
    %904 = vmatprep.subr.mxu0 0.0
    %905 = vmatpush2.msra.mxu0 0.0
    %906 = vmatprep.subr.mxu0 0.0
    %907 = vmatpush2.msra.mxu0 0.0
    %908 = vmatprep.subr.mxu0 0.0
    %909 = vmatpush2.msra.mxu0 0.0
    %910 = vmatprep.subr.mxu0 0.0
    %911 = vmatpush2.msra.mxu0 0.0
    %912 = vmatprep.subr.mxu0 0.0
    %913 = vmatpush2.msra.mxu0 0.0
    %914 = vmatprep.subr.mxu0 0.0
    %915 = vmatpush2.msra.mxu0 0.0
    %916 = vmatprep.subr.mxu0 0.0
    %917 = vmatpush2.msra.mxu0 0.0
    %918 = vmatprep.subr.mxu0 0.0
    %919 = vmatpush2.msra.mxu0 0.0
    %920 = vmatprep.subr.mxu0 0.0
    %921 = vmatpush2.msra.mxu0 0.0
    %922 = vmatprep.subr.mxu0 0.0
    %923 = vmatpush2.msra.mxu0 0.0
    %924 = vmatprep.subr.mxu0 0.0
    %925 = vmatpush2.msra.mxu0 0.0
    %926 = vmatprep.subr.mxu0 0.0
    %927 = vmatpush2.msra.mxu0 0.0
    %928 = vmatprep.subr.mxu0 0.0
    %929 = vmatpush2.msra.mxu0 0.0
    %930 = vmatprep.subr.mxu0 0.0
    %931 = vmatpush2.msra.mxu0 0.0
    %932 = vmatprep.subr.mxu0 0.0
    %933 = vmatpush2.msra.mxu0 0.0
    %934 = vmatprep.subr.mxu0 0.0
    %935 = vmatpush2.msra.mxu0 0.0
    %936 = vmatprep.mubr.f32.mxu0 0.0
    %937 = vmatmul.mubr.f32.gmra.mxu0 %v870
    %v938 = vpop.f32.mrf.mxu0
    %v939 = vadd.f32 %v323, %v938
    %v940 = vpop.f32.mrf.mxu0
    %941 = vdwg.mxu0
    %942 = vmatprep.subr.mxu0 0.0
    %943 = vmatpush1.msra.mxu0 0.0
    %944 = vmatprep.subr.mxu0 0.0
    %945 = vmatpush1.msra.mxu0 0.0
    %946 = vmatprep.subr.mxu0 0.0
    %947 = vmatpush1.msra.mxu0 0.0
    %948 = vmatprep.subr.mxu0 0.0
    %949 = vmatpush1.msra.mxu0 0.0
    %950 = vmatprep.subr.mxu0 0.0
    %951 = vmatpush1.msra.mxu0 0.0
    %952 = vmatprep.subr.mxu0 0.0
    %953 = vmatpush1.msra.mxu0 0.0
    %954 = vmatprep.subr.mxu0 0.0
    %955 = vmatpush1.msra.mxu0 0.0
    %956 = vmatprep.subr.mxu0 0.0
    %957 = vmatpush1.msra.mxu0 0.0
    %958 = vmatprep.subr.mxu0 0.0
    %959 = vmatpush1.msra.mxu0 0.0
    %960 = vmatprep.subr.mxu0 0.0
    %961 = vmatpush1.msra.mxu0 0.0
    %962 = vmatprep.subr.mxu0 0.0
    %963 = vmatpush1.msra.mxu0 0.0
    %964 = vmatprep.subr.mxu0 0.0
    %965 = vmatpush1.msra.mxu0 0.0
    %966 = vmatprep.subr.mxu0 0.0
    %967 = vmatpush1.msra.mxu0 %v64
    %968 = vmatprep.subr.mxu0 0.0
    %969 = vmatpush1.msra.mxu0 %v63
    %970 = vmatprep.subr.mxu0 0.0
    %971 = vmatpush1.msra.mxu0 %v62
    %972 = vmatprep.subr.mxu0 0.0
    %973 = vmatpush1.msra.mxu0 %v61
    %974 = vmatprep.subr.mxu0 0.0
    %975 = vmatpush2.msra.mxu0 0.0
    %976 = vmatprep.subr.mxu0 0.0
    %977 = vmatpush2.msra.mxu0 0.0
    %978 = vmatprep.subr.mxu0 0.0
    %979 = vmatpush2.msra.mxu0 0.0
    %980 = vmatprep.subr.mxu0 0.0
    %981 = vmatpush2.msra.mxu0 0.0
    %982 = vmatprep.subr.mxu0 0.0
    %983 = vmatpush2.msra.mxu0 0.0
    %984 = vmatprep.subr.mxu0 0.0
    %985 = vmatpush2.msra.mxu0 0.0
    %986 = vmatprep.subr.mxu0 0.0
    %987 = vmatpush2.msra.mxu0 0.0
    %988 = vmatprep.subr.mxu0 0.0
    %989 = vmatpush2.msra.mxu0 0.0
    %990 = vmatprep.subr.mxu0 0.0
    %991 = vmatpush2.msra.mxu0 0.0
    %992 = vmatprep.subr.mxu0 0.0
    %993 = vmatpush2.msra.mxu0 0.0
    %994 = vmatprep.subr.mxu0 0.0
    %995 = vmatpush2.msra.mxu0 0.0
    %996 = vmatprep.subr.mxu0 0.0
    %997 = vmatpush2.msra.mxu0 0.0
    %998 = vmatprep.subr.mxu0 0.0
    %999 = vmatpush2.msra.mxu0 0.0
    %1000 = vmatprep.subr.mxu0 0.0
    %1001 = vmatpush2.msra.mxu0 0.0
    %1002 = vmatprep.subr.mxu0 0.0
    %1003 = vmatpush2.msra.mxu0 0.0
    %1004 = vmatprep.subr.mxu0 0.0
    %1005 = vmatpush2.msra.mxu0 0.0
    %1006 = vmatprep.mubr.f32.mxu0 0.0
    %1007 = vmatmul.mubr.f32.gmra.mxu0 %v870
    %v1008 = vpop.f32.mrf.mxu0
    %v1009 = vadd.f32 0.0, %v1008
    %v1010 = vpop.f32.mrf.mxu0
    %1011 = vdwg.mxu0
    %v1012 = vadd.f32 %v197, %v1009
    %v1013 = vxor.u32 %v1012, 2147483648
    %v1014 = vmul.f32 %v1013, 1.442695
    %v1015 = vpow.pop %v1014
    %v1016 = vadd.f32 %v1015, 1.0
    %v1017 = vrcp.pop %v1016
    %v1018 = vmul.f32 1.0, %v1017
    %v1019 = vtanh.pop %v1012
    %v1020 = vmul.f32 %v1018, %v758
    %1022 = vrot.lane.b32.xlu0 %v1019, 32
    %v1023 = vpop.permute.xlu0 %1022
    %v1025 = vmul.f32 %v1018, %v1023
    %1027 = vrot.lane.b32.xlu0 %v1025, 32
    %v1028 = vpop.permute.xlu0 %1027
    %v1030 = vadd.f32 %v1020, %v1028
    %v1031 = vtanh.pop %v1030
    %1033 = vrot.lane.b32.xlu0 %v1031, 32
    %v1034 = vpop.permute.xlu0 %1033
    %v1036 = vmul.f32 %v1018, %v1034
    %v1037 = vsel %vm220, %v864, 0
    %1039 = vmatprep.subr.mxu0 0.0
    %1040 = vmatpush1.msra.mxu0 0.0
    %1041 = vmatprep.subr.mxu0 0.0
    %1042 = vmatpush1.msra.mxu0 0.0
    %1043 = vmatprep.subr.mxu0 0.0
    %1044 = vmatpush1.msra.mxu0 0.0
    %1045 = vmatprep.subr.mxu0 0.0
    %1046 = vmatpush1.msra.mxu0 0.0
    %1047 = vmatprep.subr.mxu0 0.0
    %1048 = vmatpush1.msra.mxu0 0.0
    %1049 = vmatprep.subr.mxu0 0.0
    %1050 = vmatpush1.msra.mxu0 0.0
    %1051 = vmatprep.subr.mxu0 0.0
    %1052 = vmatpush1.msra.mxu0 0.0
    %1053 = vmatprep.subr.mxu0 0.0
    %1054 = vmatpush1.msra.mxu0 0.0
    %1055 = vmatprep.subr.mxu0 0.0
    %1056 = vmatpush1.msra.mxu0 0.0
    %1057 = vmatprep.subr.mxu0 0.0
    %1058 = vmatpush1.msra.mxu0 0.0
    %1059 = vmatprep.subr.mxu0 0.0
    %1060 = vmatpush1.msra.mxu0 0.0
    %1061 = vmatprep.subr.mxu0 0.0
    %1062 = vmatpush1.msra.mxu0 0.0
    %1063 = vmatprep.subr.mxu0 0.0
    %1064 = vmatpush1.msra.mxu0 %v68
    %1065 = vmatprep.subr.mxu0 0.0
    %1066 = vmatpush1.msra.mxu0 %v67
    %1067 = vmatprep.subr.mxu0 0.0
    %1068 = vmatpush1.msra.mxu0 %v66
    %1069 = vmatprep.subr.mxu0 0.0
    %1070 = vmatpush1.msra.mxu0 %v65
    %1071 = vmatprep.subr.mxu0 0.0
    %1072 = vmatpush2.msra.mxu0 0.0
    %1073 = vmatprep.subr.mxu0 0.0
    %1074 = vmatpush2.msra.mxu0 0.0
    %1075 = vmatprep.subr.mxu0 0.0
    %1076 = vmatpush2.msra.mxu0 0.0
    %1077 = vmatprep.subr.mxu0 0.0
    %1078 = vmatpush2.msra.mxu0 0.0
    %1079 = vmatprep.subr.mxu0 0.0
    %1080 = vmatpush2.msra.mxu0 0.0
    %1081 = vmatprep.subr.mxu0 0.0
    %1082 = vmatpush2.msra.mxu0 0.0
    %1083 = vmatprep.subr.mxu0 0.0
    %1084 = vmatpush2.msra.mxu0 0.0
    %1085 = vmatprep.subr.mxu0 0.0
    %1086 = vmatpush2.msra.mxu0 0.0
    %1087 = vmatprep.subr.mxu0 0.0
    %1088 = vmatpush2.msra.mxu0 0.0
    %1089 = vmatprep.subr.mxu0 0.0
    %1090 = vmatpush2.msra.mxu0 0.0
    %1091 = vmatprep.subr.mxu0 0.0
    %1092 = vmatpush2.msra.mxu0 0.0
    %1093 = vmatprep.subr.mxu0 0.0
    %1094 = vmatpush2.msra.mxu0 0.0
    %1095 = vmatprep.subr.mxu0 0.0
    %1096 = vmatpush2.msra.mxu0 0.0
    %1097 = vmatprep.subr.mxu0 0.0
    %1098 = vmatpush2.msra.mxu0 0.0
    %1099 = vmatprep.subr.mxu0 0.0
    %1100 = vmatpush2.msra.mxu0 0.0
    %1101 = vmatprep.subr.mxu0 0.0
    %1102 = vmatpush2.msra.mxu0 0.0
    %1103 = vmatprep.mubr.f32.mxu0 0.0
    %1104 = vmatmul.mubr.f32.gmra.mxu0 %v1037
    %v1105 = vpop.f32.mrf.mxu0
    %v1106 = vadd.f32 0.0, %v1105
    %v1107 = vpop.f32.mrf.mxu0
    %1108 = vdwg.mxu0
    %v1109 = vadd.f32 %v939, %v1106
    %v1110 = vxor.u32 %v1109, 2147483648
    %v1111 = vmul.f32 %v1110, 1.442695
    %v1112 = vpow.pop %v1111
    %v1113 = vadd.f32 %v1112, 1.0
    %v1114 = vrcp.pop %v1113
    %v1115 = vmul.f32 1.0, %v1114
    %v1116 = vtanh.pop %v1109
    %v1117 = vmul.f32 %v1115, %v855
    %1119 = vrot.lane.b32.xlu0 %v1116, 32
    %v1120 = vpop.permute.xlu0 %1119
    %v1122 = vmul.f32 %v1115, %v1120
    %1124 = vrot.lane.b32.xlu0 %v1122, 32
    %v1125 = vpop.permute.xlu0 %1124
    %v1127 = vadd.f32 %v1117, %v1125
    %v1128 = vtanh.pop %v1127
    %1130 = vrot.lane.b32.xlu0 %v1128, 32
    %v1131 = vpop.permute.xlu0 %1130
    %v1133 = vmul.f32 %v1115, %v1131
    %1135 = vrot.lane.b32.xlu0 %v1133, 64
    %v1136 = vpop.permute.xlu0 %1135
    %1138 = vst.msk [vmem:[#allocation2 + $0x10] sm:$0xff] %vm220, %v1136
    %1140 = vrot.lane.b32.xlu0 %v1036, 64
    %v1141 = vpop.permute.xlu0 %1140
    %v1142 = vsel %vm220, %v1141, 0
    %1144 = vmatprep.subr.mxu0 0.0
    %1145 = vmatpush1.msra.mxu0 0.0
    %1146 = vmatprep.subr.mxu0 0.0
    %1147 = vmatpush1.msra.mxu0 0.0
    %1148 = vmatprep.subr.mxu0 0.0
    %1149 = vmatpush1.msra.mxu0 0.0
    %1150 = vmatprep.subr.mxu0 0.0
    %1151 = vmatpush1.msra.mxu0 0.0
    %1152 = vmatprep.subr.mxu0 0.0
    %1153 = vmatpush1.msra.mxu0 0.0
    %1154 = vmatprep.subr.mxu0 0.0
    %1155 = vmatpush1.msra.mxu0 0.0
    %1156 = vmatprep.subr.mxu0 0.0
    %1157 = vmatpush1.msra.mxu0 0.0
    %1158 = vmatprep.subr.mxu0 0.0
    %1159 = vmatpush1.msra.mxu0 0.0
    %1160 = vmatprep.subr.mxu0 0.0
    %1161 = vmatpush1.msra.mxu0 0.0
    %1162 = vmatprep.subr.mxu0 0.0
    %1163 = vmatpush1.msra.mxu0 0.0
    %1164 = vmatprep.subr.mxu0 0.0
    %1165 = vmatpush1.msra.mxu0 0.0
    %1166 = vmatprep.subr.mxu0 0.0
    %1167 = vmatpush1.msra.mxu0 0.0
    %1168 = vmatprep.subr.mxu0 0.0
    %1169 = vmatpush1.msra.mxu0 %v72
    %1170 = vmatprep.subr.mxu0 0.0
    %1171 = vmatpush1.msra.mxu0 %v71
    %1172 = vmatprep.subr.mxu0 0.0
    %1173 = vmatpush1.msra.mxu0 %v70
    %1174 = vmatprep.subr.mxu0 0.0
    %1175 = vmatpush1.msra.mxu0 %v69
    %1176 = vmatprep.subr.mxu0 0.0
    %1177 = vmatpush2.msra.mxu0 0.0
    %1178 = vmatprep.subr.mxu0 0.0
    %1179 = vmatpush2.msra.mxu0 0.0
    %1180 = vmatprep.subr.mxu0 0.0
    %1181 = vmatpush2.msra.mxu0 0.0
    %1182 = vmatprep.subr.mxu0 0.0
    %1183 = vmatpush2.msra.mxu0 0.0
    %1184 = vmatprep.subr.mxu0 0.0
    %1185 = vmatpush2.msra.mxu0 0.0
    %1186 = vmatprep.subr.mxu0 0.0
    %1187 = vmatpush2.msra.mxu0 0.0
    %1188 = vmatprep.subr.mxu0 0.0
    %1189 = vmatpush2.msra.mxu0 0.0
    %1190 = vmatprep.subr.mxu0 0.0
    %1191 = vmatpush2.msra.mxu0 0.0
    %1192 = vmatprep.subr.mxu0 0.0
    %1193 = vmatpush2.msra.mxu0 0.0
    %1194 = vmatprep.subr.mxu0 0.0
    %1195 = vmatpush2.msra.mxu0 0.0
    %1196 = vmatprep.subr.mxu0 0.0
    %1197 = vmatpush2.msra.mxu0 0.0
    %1198 = vmatprep.subr.mxu0 0.0
    %1199 = vmatpush2.msra.mxu0 0.0
    %1200 = vmatprep.subr.mxu0 0.0
    %1201 = vmatpush2.msra.mxu0 0.0
    %1202 = vmatprep.subr.mxu0 0.0
    %1203 = vmatpush2.msra.mxu0 0.0
    %1204 = vmatprep.subr.mxu0 0.0
    %1205 = vmatpush2.msra.mxu0 0.0
    %1206 = vmatprep.subr.mxu0 0.0
    %1207 = vmatpush2.msra.mxu0 0.0
    %1208 = vmatprep.mubr.f32.mxu0 0.0
    %1209 = vmatmul.mubr.f32.gmra.mxu0 %v1142
    %v1210 = vpop.f32.mrf.mxu0
    %v1211 = vadd.f32 %v323, %v1210
    %v1212 = vpop.f32.mrf.mxu0
    %1213 = vdwg.mxu0
    %1214 = vmatprep.subr.mxu0 0.0
    %1215 = vmatpush1.msra.mxu0 0.0
    %1216 = vmatprep.subr.mxu0 0.0
    %1217 = vmatpush1.msra.mxu0 0.0
    %1218 = vmatprep.subr.mxu0 0.0
    %1219 = vmatpush1.msra.mxu0 0.0
    %1220 = vmatprep.subr.mxu0 0.0
    %1221 = vmatpush1.msra.mxu0 0.0
    %1222 = vmatprep.subr.mxu0 0.0
    %1223 = vmatpush1.msra.mxu0 0.0
    %1224 = vmatprep.subr.mxu0 0.0
    %1225 = vmatpush1.msra.mxu0 0.0
    %1226 = vmatprep.subr.mxu0 0.0
    %1227 = vmatpush1.msra.mxu0 0.0
    %1228 = vmatprep.subr.mxu0 0.0
    %1229 = vmatpush1.msra.mxu0 0.0
    %1230 = vmatprep.subr.mxu0 0.0
    %1231 = vmatpush1.msra.mxu0 0.0
    %1232 = vmatprep.subr.mxu0 0.0
    %1233 = vmatpush1.msra.mxu0 0.0
    %1234 = vmatprep.subr.mxu0 0.0
    %1235 = vmatpush1.msra.mxu0 0.0
    %1236 = vmatprep.subr.mxu0 0.0
    %1237 = vmatpush1.msra.mxu0 0.0
    %1238 = vmatprep.subr.mxu0 0.0
    %1239 = vmatpush1.msra.mxu0 %v64
    %1240 = vmatprep.subr.mxu0 0.0
    %1241 = vmatpush1.msra.mxu0 %v63
    %1242 = vmatprep.subr.mxu0 0.0
    %1243 = vmatpush1.msra.mxu0 %v62
    %1244 = vmatprep.subr.mxu0 0.0
    %1245 = vmatpush1.msra.mxu0 %v61
    %1246 = vmatprep.subr.mxu0 0.0
    %1247 = vmatpush2.msra.mxu0 0.0
    %1248 = vmatprep.subr.mxu0 0.0
    %1249 = vmatpush2.msra.mxu0 0.0
    %1250 = vmatprep.subr.mxu0 0.0
    %1251 = vmatpush2.msra.mxu0 0.0
    %1252 = vmatprep.subr.mxu0 0.0
    %1253 = vmatpush2.msra.mxu0 0.0
    %1254 = vmatprep.subr.mxu0 0.0
    %1255 = vmatpush2.msra.mxu0 0.0
    %1256 = vmatprep.subr.mxu0 0.0
    %1257 = vmatpush2.msra.mxu0 0.0
    %1258 = vmatprep.subr.mxu0 0.0
    %1259 = vmatpush2.msra.mxu0 0.0
    %1260 = vmatprep.subr.mxu0 0.0
    %1261 = vmatpush2.msra.mxu0 0.0
    %1262 = vmatprep.subr.mxu0 0.0
    %1263 = vmatpush2.msra.mxu0 0.0
    %1264 = vmatprep.subr.mxu0 0.0
    %1265 = vmatpush2.msra.mxu0 0.0
    %1266 = vmatprep.subr.mxu0 0.0
    %1267 = vmatpush2.msra.mxu0 0.0
    %1268 = vmatprep.subr.mxu0 0.0
    %1269 = vmatpush2.msra.mxu0 0.0
    %1270 = vmatprep.subr.mxu0 0.0
    %1271 = vmatpush2.msra.mxu0 0.0
    %1272 = vmatprep.subr.mxu0 0.0
    %1273 = vmatpush2.msra.mxu0 0.0
    %1274 = vmatprep.subr.mxu0 0.0
    %1275 = vmatpush2.msra.mxu0 0.0
    %1276 = vmatprep.subr.mxu0 0.0
    %1277 = vmatpush2.msra.mxu0 0.0
    %1278 = vmatprep.mubr.f32.mxu0 0.0
    %1279 = vmatmul.mubr.f32.gmra.mxu0 %v1142
    %v1280 = vpop.f32.mrf.mxu0
    %v1281 = vadd.f32 0.0, %v1280
    %v1282 = vpop.f32.mrf.mxu0
    %1283 = vdwg.mxu0
    %v1284 = vadd.f32 %v202, %v1281
    %v1285 = vxor.u32 %v1284, 2147483648
    %v1286 = vmul.f32 %v1285, 1.442695
    %v1287 = vpow.pop %v1286
    %v1288 = vadd.f32 %v1287, 1.0
    %v1289 = vrcp.pop %v1288
    %v1290 = vmul.f32 1.0, %v1289
    %v1291 = vtanh.pop %v1284
    %v1292 = vmul.f32 %v1290, %v1030
    %1294 = vrot.lane.b32.xlu0 %v1291, 32
    %v1295 = vpop.permute.xlu0 %1294
    %v1297 = vmul.f32 %v1290, %v1295
    %1299 = vrot.lane.b32.xlu0 %v1297, 32
    %v1300 = vpop.permute.xlu0 %1299
    %v1302 = vadd.f32 %v1292, %v1300
    %v1303 = vtanh.pop %v1302
    %1305 = vrot.lane.b32.xlu0 %v1303, 32
    %v1306 = vpop.permute.xlu0 %1305
    %v1308 = vmul.f32 %v1290, %v1306
    %v1309 = vsel %vm220, %v1136, 0
    %1311 = vmatprep.subr.mxu0 0.0
    %1312 = vmatpush1.msra.mxu0 0.0
    %1313 = vmatprep.subr.mxu0 0.0
    %1314 = vmatpush1.msra.mxu0 0.0
    %1315 = vmatprep.subr.mxu0 0.0
    %1316 = vmatpush1.msra.mxu0 0.0
    %1317 = vmatprep.subr.mxu0 0.0
    %1318 = vmatpush1.msra.mxu0 0.0
    %1319 = vmatprep.subr.mxu0 0.0
    %1320 = vmatpush1.msra.mxu0 0.0
    %1321 = vmatprep.subr.mxu0 0.0
    %1322 = vmatpush1.msra.mxu0 0.0
    %1323 = vmatprep.subr.mxu0 0.0
    %1324 = vmatpush1.msra.mxu0 0.0
    %1325 = vmatprep.subr.mxu0 0.0
    %1326 = vmatpush1.msra.mxu0 0.0
    %1327 = vmatprep.subr.mxu0 0.0
    %1328 = vmatpush1.msra.mxu0 0.0
    %1329 = vmatprep.subr.mxu0 0.0
    %1330 = vmatpush1.msra.mxu0 0.0
    %1331 = vmatprep.subr.mxu0 0.0
    %1332 = vmatpush1.msra.mxu0 0.0
    %1333 = vmatprep.subr.mxu0 0.0
    %1334 = vmatpush1.msra.mxu0 0.0
    %1335 = vmatprep.subr.mxu0 0.0
    %1336 = vmatpush1.msra.mxu0 %v68
    %1337 = vmatprep.subr.mxu0 0.0
    %1338 = vmatpush1.msra.mxu0 %v67
    %1339 = vmatprep.subr.mxu0 0.0
    %1340 = vmatpush1.msra.mxu0 %v66
    %1341 = vmatprep.subr.mxu0 0.0
    %1342 = vmatpush1.msra.mxu0 %v65
    %1343 = vmatprep.subr.mxu0 0.0
    %1344 = vmatpush2.msra.mxu0 0.0
    %1345 = vmatprep.subr.mxu0 0.0
    %1346 = vmatpush2.msra.mxu0 0.0
    %1347 = vmatprep.subr.mxu0 0.0
    %1348 = vmatpush2.msra.mxu0 0.0
    %1349 = vmatprep.subr.mxu0 0.0
    %1350 = vmatpush2.msra.mxu0 0.0
    %1351 = vmatprep.subr.mxu0 0.0
    %1352 = vmatpush2.msra.mxu0 0.0
    %1353 = vmatprep.subr.mxu0 0.0
    %1354 = vmatpush2.msra.mxu0 0.0
    %1355 = vmatprep.subr.mxu0 0.0
    %1356 = vmatpush2.msra.mxu0 0.0
    %1357 = vmatprep.subr.mxu0 0.0
    %1358 = vmatpush2.msra.mxu0 0.0
    %1359 = vmatprep.subr.mxu0 0.0
    %1360 = vmatpush2.msra.mxu0 0.0
    %1361 = vmatprep.subr.mxu0 0.0
    %1362 = vmatpush2.msra.mxu0 0.0
    %1363 = vmatprep.subr.mxu0 0.0
    %1364 = vmatpush2.msra.mxu0 0.0
    %1365 = vmatprep.subr.mxu0 0.0
    %1366 = vmatpush2.msra.mxu0 0.0
    %1367 = vmatprep.subr.mxu0 0.0
    %1368 = vmatpush2.msra.mxu0 0.0
    %1369 = vmatprep.subr.mxu0 0.0
    %1370 = vmatpush2.msra.mxu0 0.0
    %1371 = vmatprep.subr.mxu0 0.0
    %1372 = vmatpush2.msra.mxu0 0.0
    %1373 = vmatprep.subr.mxu0 0.0
    %1374 = vmatpush2.msra.mxu0 0.0
    %1375 = vmatprep.mubr.f32.mxu0 0.0
    %1376 = vmatmul.mubr.f32.gmra.mxu0 %v1309
    %v1377 = vpop.f32.mrf.mxu0
    %v1378 = vadd.f32 0.0, %v1377
    %v1379 = vpop.f32.mrf.mxu0
    %1380 = vdwg.mxu0
    %v1381 = vadd.f32 %v1211, %v1378
    %v1382 = vxor.u32 %v1381, 2147483648
    %v1383 = vmul.f32 %v1382, 1.442695
    %v1384 = vpow.pop %v1383
    %v1385 = vadd.f32 %v1384, 1.0
    %v1386 = vrcp.pop %v1385
    %v1387 = vmul.f32 1.0, %v1386
    %v1388 = vtanh.pop %v1381
    %v1389 = vmul.f32 %v1387, %v1127
    %1391 = vrot.lane.b32.xlu0 %v1388, 32
    %v1392 = vpop.permute.xlu0 %1391
    %v1394 = vmul.f32 %v1387, %v1392
    %1396 = vrot.lane.b32.xlu0 %v1394, 32
    %v1397 = vpop.permute.xlu0 %1396
    %v1399 = vadd.f32 %v1389, %v1397
    %v1400 = vtanh.pop %v1399
    %1402 = vrot.lane.b32.xlu0 %v1400, 32
    %v1403 = vpop.permute.xlu0 %1402
    %v1405 = vmul.f32 %v1387, %v1403
    %1407 = vrot.lane.b32.xlu0 %v1405, 64
    %v1408 = vpop.permute.xlu0 %1407
    %1410 = vst.msk [vmem:[#allocation2 + $0x18] sm:$0xff] %vm220, %v1408
    %1412 = vrot.lane.b32.xlu0 %v1308, 64
    %v1413 = vpop.permute.xlu0 %1412
    %v1414 = vsel %vm220, %v1413, 0
    %1416 = vmatprep.subr.mxu0 0.0
    %1417 = vmatpush1.msra.mxu0 0.0
    %1418 = vmatprep.subr.mxu0 0.0
    %1419 = vmatpush1.msra.mxu0 0.0
    %1420 = vmatprep.subr.mxu0 0.0
    %1421 = vmatpush1.msra.mxu0 0.0
    %1422 = vmatprep.subr.mxu0 0.0
    %1423 = vmatpush1.msra.mxu0 0.0
    %1424 = vmatprep.subr.mxu0 0.0
    %1425 = vmatpush1.msra.mxu0 0.0
    %1426 = vmatprep.subr.mxu0 0.0
    %1427 = vmatpush1.msra.mxu0 0.0
    %1428 = vmatprep.subr.mxu0 0.0
    %1429 = vmatpush1.msra.mxu0 0.0
    %1430 = vmatprep.subr.mxu0 0.0
    %1431 = vmatpush1.msra.mxu0 0.0
    %1432 = vmatprep.subr.mxu0 0.0
    %1433 = vmatpush1.msra.mxu0 0.0
    %1434 = vmatprep.subr.mxu0 0.0
    %1435 = vmatpush1.msra.mxu0 0.0
    %1436 = vmatprep.subr.mxu0 0.0
    %1437 = vmatpush1.msra.mxu0 0.0
    %1438 = vmatprep.subr.mxu0 0.0
    %1439 = vmatpush1.msra.mxu0 0.0
    %1440 = vmatprep.subr.mxu0 0.0
    %1441 = vmatpush1.msra.mxu0 %v72
    %1442 = vmatprep.subr.mxu0 0.0
    %1443 = vmatpush1.msra.mxu0 %v71
    %1444 = vmatprep.subr.mxu0 0.0
    %1445 = vmatpush1.msra.mxu0 %v70
    %1446 = vmatprep.subr.mxu0 0.0
    %1447 = vmatpush1.msra.mxu0 %v69
    %1448 = vmatprep.subr.mxu0 0.0
    %1449 = vmatpush2.msra.mxu0 0.0
    %1450 = vmatprep.subr.mxu0 0.0
    %1451 = vmatpush2.msra.mxu0 0.0
    %1452 = vmatprep.subr.mxu0 0.0
    %1453 = vmatpush2.msra.mxu0 0.0
    %1454 = vmatprep.subr.mxu0 0.0
    %1455 = vmatpush2.msra.mxu0 0.0
    %1456 = vmatprep.subr.mxu0 0.0
    %1457 = vmatpush2.msra.mxu0 0.0
    %1458 = vmatprep.subr.mxu0 0.0
    %1459 = vmatpush2.msra.mxu0 0.0
    %1460 = vmatprep.subr.mxu0 0.0
    %1461 = vmatpush2.msra.mxu0 0.0
    %1462 = vmatprep.subr.mxu0 0.0
    %1463 = vmatpush2.msra.mxu0 0.0
    %1464 = vmatprep.subr.mxu0 0.0
    %1465 = vmatpush2.msra.mxu0 0.0
    %1466 = vmatprep.subr.mxu0 0.0
    %1467 = vmatpush2.msra.mxu0 0.0
    %1468 = vmatprep.subr.mxu0 0.0
    %1469 = vmatpush2.msra.mxu0 0.0
    %1470 = vmatprep.subr.mxu0 0.0
    %1471 = vmatpush2.msra.mxu0 0.0
    %1472 = vmatprep.subr.mxu0 0.0
    %1473 = vmatpush2.msra.mxu0 0.0
    %1474 = vmatprep.subr.mxu0 0.0
    %1475 = vmatpush2.msra.mxu0 0.0
    %1476 = vmatprep.subr.mxu0 0.0
    %1477 = vmatpush2.msra.mxu0 0.0
    %1478 = vmatprep.subr.mxu0 0.0
    %1479 = vmatpush2.msra.mxu0 0.0
    %1480 = vmatprep.mubr.f32.mxu0 0.0
    %1481 = vmatmul.mubr.f32.gmra.mxu0 %v1414
    %v1482 = vpop.f32.mrf.mxu0
    %v1483 = vadd.f32 %v323, %v1482
    %v1484 = vpop.f32.mrf.mxu0
    %1485 = vdwg.mxu0
    %1486 = vmatprep.subr.mxu0 0.0
    %1487 = vmatpush1.msra.mxu0 0.0
    %1488 = vmatprep.subr.mxu0 0.0
    %1489 = vmatpush1.msra.mxu0 0.0
    %1490 = vmatprep.subr.mxu0 0.0
    %1491 = vmatpush1.msra.mxu0 0.0
    %1492 = vmatprep.subr.mxu0 0.0
    %1493 = vmatpush1.msra.mxu0 0.0
    %1494 = vmatprep.subr.mxu0 0.0
    %1495 = vmatpush1.msra.mxu0 0.0
    %1496 = vmatprep.subr.mxu0 0.0
    %1497 = vmatpush1.msra.mxu0 0.0
    %1498 = vmatprep.subr.mxu0 0.0
    %1499 = vmatpush1.msra.mxu0 0.0
    %1500 = vmatprep.subr.mxu0 0.0
    %1501 = vmatpush1.msra.mxu0 0.0
    %1502 = vmatprep.subr.mxu0 0.0
    %1503 = vmatpush1.msra.mxu0 0.0
    %1504 = vmatprep.subr.mxu0 0.0
    %1505 = vmatpush1.msra.mxu0 0.0
    %1506 = vmatprep.subr.mxu0 0.0
    %1507 = vmatpush1.msra.mxu0 0.0
    %1508 = vmatprep.subr.mxu0 0.0
    %1509 = vmatpush1.msra.mxu0 0.0
    %1510 = vmatprep.subr.mxu0 0.0
    %1511 = vmatpush1.msra.mxu0 %v64
    %1512 = vmatprep.subr.mxu0 0.0
    %1513 = vmatpush1.msra.mxu0 %v63
    %1514 = vmatprep.subr.mxu0 0.0
    %1515 = vmatpush1.msra.mxu0 %v62
    %1516 = vmatprep.subr.mxu0 0.0
    %1517 = vmatpush1.msra.mxu0 %v61
    %1518 = vmatprep.subr.mxu0 0.0
    %1519 = vmatpush2.msra.mxu0 0.0
    %1520 = vmatprep.subr.mxu0 0.0
    %1521 = vmatpush2.msra.mxu0 0.0
    %1522 = vmatprep.subr.mxu0 0.0
    %1523 = vmatpush2.msra.mxu0 0.0
    %1524 = vmatprep.subr.mxu0 0.0
    %1525 = vmatpush2.msra.mxu0 0.0
    %1526 = vmatprep.subr.mxu0 0.0
    %1527 = vmatpush2.msra.mxu0 0.0
    %1528 = vmatprep.subr.mxu0 0.0
    %1529 = vmatpush2.msra.mxu0 0.0
    %1530 = vmatprep.subr.mxu0 0.0
    %1531 = vmatpush2.msra.mxu0 0.0
    %1532 = vmatprep.subr.mxu0 0.0
    %1533 = vmatpush2.msra.mxu0 0.0
    %1534 = vmatprep.subr.mxu0 0.0
    %1535 = vmatpush2.msra.mxu0 0.0
    %1536 = vmatprep.subr.mxu0 0.0
    %1537 = vmatpush2.msra.mxu0 0.0
    %1538 = vmatprep.subr.mxu0 0.0
    %1539 = vmatpush2.msra.mxu0 0.0
    %1540 = vmatprep.subr.mxu0 0.0
    %1541 = vmatpush2.msra.mxu0 0.0
    %1542 = vmatprep.subr.mxu0 0.0
    %1543 = vmatpush2.msra.mxu0 0.0
    %1544 = vmatprep.subr.mxu0 0.0
    %1545 = vmatpush2.msra.mxu0 0.0
    %1546 = vmatprep.subr.mxu0 0.0
    %1547 = vmatpush2.msra.mxu0 0.0
    %1548 = vmatprep.subr.mxu0 0.0
    %1549 = vmatpush2.msra.mxu0 0.0
    %1550 = vmatprep.mubr.f32.mxu0 0.0
    %1551 = vmatmul.mubr.f32.gmra.mxu0 %v1414
    %v1552 = vpop.f32.mrf.mxu0
    %v1553 = vadd.f32 0.0, %v1552
    %v1554 = vpop.f32.mrf.mxu0
    %1555 = vdwg.mxu0
    %v1556 = vadd.f32 %v207, %v1553
    %v1557 = vxor.u32 %v1556, 2147483648
    %v1558 = vmul.f32 %v1557, 1.442695
    %v1559 = vpow.pop %v1558
    %v1560 = vadd.f32 %v1559, 1.0
    %v1561 = vrcp.pop %v1560
    %v1562 = vmul.f32 1.0, %v1561
    %v1563 = vtanh.pop %v1556
    %v1564 = vmul.f32 %v1562, %v1302
    %1566 = vrot.lane.b32.xlu0 %v1563, 32
    %v1567 = vpop.permute.xlu0 %1566
    %v1569 = vmul.f32 %v1562, %v1567
    %1571 = vrot.lane.b32.xlu0 %v1569, 32
    %v1572 = vpop.permute.xlu0 %1571
    %v1574 = vadd.f32 %v1564, %v1572
    %v1575 = vtanh.pop %v1574
    %1577 = vrot.lane.b32.xlu0 %v1575, 32
    %v1578 = vpop.permute.xlu0 %1577
    %v1580 = vmul.f32 %v1562, %v1578
    %v1581 = vsel %vm220, %v1408, 0
    %1583 = vmatprep.subr.mxu0 0.0
    %1584 = vmatpush1.msra.mxu0 0.0
    %1585 = vmatprep.subr.mxu0 0.0
    %1586 = vmatpush1.msra.mxu0 0.0
    %1587 = vmatprep.subr.mxu0 0.0
    %1588 = vmatpush1.msra.mxu0 0.0
    %1589 = vmatprep.subr.mxu0 0.0
    %1590 = vmatpush1.msra.mxu0 0.0
    %1591 = vmatprep.subr.mxu0 0.0
    %1592 = vmatpush1.msra.mxu0 0.0
    %1593 = vmatprep.subr.mxu0 0.0
    %1594 = vmatpush1.msra.mxu0 0.0
    %1595 = vmatprep.subr.mxu0 0.0
    %1596 = vmatpush1.msra.mxu0 0.0
    %1597 = vmatprep.subr.mxu0 0.0
    %1598 = vmatpush1.msra.mxu0 0.0
    %1599 = vmatprep.subr.mxu0 0.0
    %1600 = vmatpush1.msra.mxu0 0.0
    %1601 = vmatprep.subr.mxu0 0.0
    %1602 = vmatpush1.msra.mxu0 0.0
    %1603 = vmatprep.subr.mxu0 0.0
    %1604 = vmatpush1.msra.mxu0 0.0
    %1605 = vmatprep.subr.mxu0 0.0
    %1606 = vmatpush1.msra.mxu0 0.0
    %1607 = vmatprep.subr.mxu0 0.0
    %1608 = vmatpush1.msra.mxu0 %v68
    %1609 = vmatprep.subr.mxu0 0.0
    %1610 = vmatpush1.msra.mxu0 %v67
    %1611 = vmatprep.subr.mxu0 0.0
    %1612 = vmatpush1.msra.mxu0 %v66
    %1613 = vmatprep.subr.mxu0 0.0
    %1614 = vmatpush1.msra.mxu0 %v65
    %1615 = vmatprep.subr.mxu0 0.0
    %1616 = vmatpush2.msra.mxu0 0.0
    %1617 = vmatprep.subr.mxu0 0.0
    %1618 = vmatpush2.msra.mxu0 0.0
    %1619 = vmatprep.subr.mxu0 0.0
    %1620 = vmatpush2.msra.mxu0 0.0
    %1621 = vmatprep.subr.mxu0 0.0
    %1622 = vmatpush2.msra.mxu0 0.0
    %1623 = vmatprep.subr.mxu0 0.0
    %1624 = vmatpush2.msra.mxu0 0.0
    %1625 = vmatprep.subr.mxu0 0.0
    %1626 = vmatpush2.msra.mxu0 0.0
    %1627 = vmatprep.subr.mxu0 0.0
    %1628 = vmatpush2.msra.mxu0 0.0
    %1629 = vmatprep.subr.mxu0 0.0
    %1630 = vmatpush2.msra.mxu0 0.0
    %1631 = vmatprep.subr.mxu0 0.0
    %1632 = vmatpush2.msra.mxu0 0.0
    %1633 = vmatprep.subr.mxu0 0.0
    %1634 = vmatpush2.msra.mxu0 0.0
    %1635 = vmatprep.subr.mxu0 0.0
    %1636 = vmatpush2.msra.mxu0 0.0
    %1637 = vmatprep.subr.mxu0 0.0
    %1638 = vmatpush2.msra.mxu0 0.0
    %1639 = vmatprep.subr.mxu0 0.0
    %1640 = vmatpush2.msra.mxu0 0.0
    %1641 = vmatprep.subr.mxu0 0.0
    %1642 = vmatpush2.msra.mxu0 0.0
    %1643 = vmatprep.subr.mxu0 0.0
    %1644 = vmatpush2.msra.mxu0 0.0
    %1645 = vmatprep.subr.mxu0 0.0
    %1646 = vmatpush2.msra.mxu0 0.0
    %1647 = vmatprep.mubr.f32.mxu0 0.0
    %1648 = vmatmul.mubr.f32.gmra.mxu0 %v1581
    %v1649 = vpop.f32.mrf.mxu0
    %v1650 = vadd.f32 0.0, %v1649
    %v1651 = vpop.f32.mrf.mxu0
    %1652 = vdwg.mxu0
    %v1653 = vadd.f32 %v1483, %v1650
    %v1654 = vxor.u32 %v1653, 2147483648
    %v1655 = vmul.f32 %v1654, 1.442695
    %v1656 = vpow.pop %v1655
    %v1657 = vadd.f32 %v1656, 1.0
    %v1658 = vrcp.pop %v1657
    %v1659 = vmul.f32 1.0, %v1658
    %v1660 = vtanh.pop %v1653
    %v1661 = vmul.f32 %v1659, %v1399
    %1663 = vrot.lane.b32.xlu0 %v1660, 32
    %v1664 = vpop.permute.xlu0 %1663
    %v1666 = vmul.f32 %v1659, %v1664
    %1668 = vrot.lane.b32.xlu0 %v1666, 32
    %v1669 = vpop.permute.xlu0 %1668
    %v1671 = vadd.f32 %v1661, %v1669
    %v1672 = vtanh.pop %v1671
    %1674 = vrot.lane.b32.xlu0 %v1672, 32
    %v1675 = vpop.permute.xlu0 %1674
    %v1677 = vmul.f32 %v1659, %v1675
    %1679 = vrot.lane.b32.xlu0 %v1677, 64
    %v1680 = vpop.permute.xlu0 %1679
    %1682 = vst.msk [vmem:[#allocation2 + $0x20] sm:$0xff] %vm220, %v1680
    %1684 = vrot.lane.b32.xlu0 %v1580, 64
    %v1685 = vpop.permute.xlu0 %1684
    %v1686 = vsel %vm220, %v1685, 0
    %1688 = vmatprep.subr.mxu0 0.0
    %1689 = vmatpush1.msra.mxu0 0.0
    %1690 = vmatprep.subr.mxu0 0.0
    %1691 = vmatpush1.msra.mxu0 0.0
    %1692 = vmatprep.subr.mxu0 0.0
    %1693 = vmatpush1.msra.mxu0 0.0
    %1694 = vmatprep.subr.mxu0 0.0
    %1695 = vmatpush1.msra.mxu0 0.0
    %1696 = vmatprep.subr.mxu0 0.0
    %1697 = vmatpush1.msra.mxu0 0.0
    %1698 = vmatprep.subr.mxu0 0.0
    %1699 = vmatpush1.msra.mxu0 0.0
    %1700 = vmatprep.subr.mxu0 0.0
    %1701 = vmatpush1.msra.mxu0 0.0
    %1702 = vmatprep.subr.mxu0 0.0
    %1703 = vmatpush1.msra.mxu0 0.0
    %1704 = vmatprep.subr.mxu0 0.0
    %1705 = vmatpush1.msra.mxu0 0.0
    %1706 = vmatprep.subr.mxu0 0.0
    %1707 = vmatpush1.msra.mxu0 0.0
    %1708 = vmatprep.subr.mxu0 0.0
    %1709 = vmatpush1.msra.mxu0 0.0
    %1710 = vmatprep.subr.mxu0 0.0
    %1711 = vmatpush1.msra.mxu0 0.0
    %1712 = vmatprep.subr.mxu0 0.0
    %1713 = vmatpush1.msra.mxu0 %v72
    %1714 = vmatprep.subr.mxu0 0.0
    %1715 = vmatpush1.msra.mxu0 %v71
    %1716 = vmatprep.subr.mxu0 0.0
    %1717 = vmatpush1.msra.mxu0 %v70
    %1718 = vmatprep.subr.mxu0 0.0
    %1719 = vmatpush1.msra.mxu0 %v69
    %1720 = vmatprep.subr.mxu0 0.0
    %1721 = vmatpush2.msra.mxu0 0.0
    %1722 = vmatprep.subr.mxu0 0.0
    %1723 = vmatpush2.msra.mxu0 0.0
    %1724 = vmatprep.subr.mxu0 0.0
    %1725 = vmatpush2.msra.mxu0 0.0
    %1726 = vmatprep.subr.mxu0 0.0
    %1727 = vmatpush2.msra.mxu0 0.0
    %1728 = vmatprep.subr.mxu0 0.0
    %1729 = vmatpush2.msra.mxu0 0.0
    %1730 = vmatprep.subr.mxu0 0.0
    %1731 = vmatpush2.msra.mxu0 0.0
    %1732 = vmatprep.subr.mxu0 0.0
    %1733 = vmatpush2.msra.mxu0 0.0
    %1734 = vmatprep.subr.mxu0 0.0
    %1735 = vmatpush2.msra.mxu0 0.0
    %1736 = vmatprep.subr.mxu0 0.0
    %1737 = vmatpush2.msra.mxu0 0.0
    %1738 = vmatprep.subr.mxu0 0.0
    %1739 = vmatpush2.msra.mxu0 0.0
    %1740 = vmatprep.subr.mxu0 0.0
    %1741 = vmatpush2.msra.mxu0 0.0
    %1742 = vmatprep.subr.mxu0 0.0
    %1743 = vmatpush2.msra.mxu0 0.0
    %1744 = vmatprep.subr.mxu0 0.0
    %1745 = vmatpush2.msra.mxu0 0.0
    %1746 = vmatprep.subr.mxu0 0.0
    %1747 = vmatpush2.msra.mxu0 0.0
    %1748 = vmatprep.subr.mxu0 0.0
    %1749 = vmatpush2.msra.mxu0 0.0
    %1750 = vmatprep.subr.mxu0 0.0
    %1751 = vmatpush2.msra.mxu0 0.0
    %1752 = vmatprep.mubr.f32.mxu0 0.0
    %1753 = vmatmul.mubr.f32.gmra.mxu0 %v1686
    %v1754 = vpop.f32.mrf.mxu0
    %v1755 = vadd.f32 %v323, %v1754
    %v1756 = vpop.f32.mrf.mxu0
    %1757 = vdwg.mxu0
    %1758 = vmatprep.subr.mxu0 0.0
    %1759 = vmatpush1.msra.mxu0 0.0
    %1760 = vmatprep.subr.mxu0 0.0
    %1761 = vmatpush1.msra.mxu0 0.0
    %1762 = vmatprep.subr.mxu0 0.0
    %1763 = vmatpush1.msra.mxu0 0.0
    %1764 = vmatprep.subr.mxu0 0.0
    %1765 = vmatpush1.msra.mxu0 0.0
    %1766 = vmatprep.subr.mxu0 0.0
    %1767 = vmatpush1.msra.mxu0 0.0
    %1768 = vmatprep.subr.mxu0 0.0
    %1769 = vmatpush1.msra.mxu0 0.0
    %1770 = vmatprep.subr.mxu0 0.0
    %1771 = vmatpush1.msra.mxu0 0.0
    %1772 = vmatprep.subr.mxu0 0.0
    %1773 = vmatpush1.msra.mxu0 0.0
    %1774 = vmatprep.subr.mxu0 0.0
    %1775 = vmatpush1.msra.mxu0 0.0
    %1776 = vmatprep.subr.mxu0 0.0
    %1777 = vmatpush1.msra.mxu0 0.0
    %1778 = vmatprep.subr.mxu0 0.0
    %1779 = vmatpush1.msra.mxu0 0.0
    %1780 = vmatprep.subr.mxu0 0.0
    %1781 = vmatpush1.msra.mxu0 0.0
    %1782 = vmatprep.subr.mxu0 0.0
    %1783 = vmatpush1.msra.mxu0 %v64
    %1784 = vmatprep.subr.mxu0 0.0
    %1785 = vmatpush1.msra.mxu0 %v63
    %1786 = vmatprep.subr.mxu0 0.0
    %1787 = vmatpush1.msra.mxu0 %v62
    %1788 = vmatprep.subr.mxu0 0.0
    %1789 = vmatpush1.msra.mxu0 %v61
    %1790 = vmatprep.subr.mxu0 0.0
    %1791 = vmatpush2.msra.mxu0 0.0
    %1792 = vmatprep.subr.mxu0 0.0
    %1793 = vmatpush2.msra.mxu0 0.0
    %1794 = vmatprep.subr.mxu0 0.0
    %1795 = vmatpush2.msra.mxu0 0.0
    %1796 = vmatprep.subr.mxu0 0.0
    %1797 = vmatpush2.msra.mxu0 0.0
    %1798 = vmatprep.subr.mxu0 0.0
    %1799 = vmatpush2.msra.mxu0 0.0
    %1800 = vmatprep.subr.mxu0 0.0
    %1801 = vmatpush2.msra.mxu0 0.0
    %1802 = vmatprep.subr.mxu0 0.0
    %1803 = vmatpush2.msra.mxu0 0.0
    %1804 = vmatprep.subr.mxu0 0.0
    %1805 = vmatpush2.msra.mxu0 0.0
    %1806 = vmatprep.subr.mxu0 0.0
    %1807 = vmatpush2.msra.mxu0 0.0
    %1808 = vmatprep.subr.mxu0 0.0
    %1809 = vmatpush2.msra.mxu0 0.0
    %1810 = vmatprep.subr.mxu0 0.0
    %1811 = vmatpush2.msra.mxu0 0.0
    %1812 = vmatprep.subr.mxu0 0.0
    %1813 = vmatpush2.msra.mxu0 0.0
    %1814 = vmatprep.subr.mxu0 0.0
    %1815 = vmatpush2.msra.mxu0 0.0
    %1816 = vmatprep.subr.mxu0 0.0
    %1817 = vmatpush2.msra.mxu0 0.0
    %1818 = vmatprep.subr.mxu0 0.0
    %1819 = vmatpush2.msra.mxu0 0.0
    %1820 = vmatprep.subr.mxu0 0.0
    %1821 = vmatpush2.msra.mxu0 0.0
    %1822 = vmatprep.mubr.f32.mxu0 0.0
    %1823 = vmatmul.mubr.f32.gmra.mxu0 %v1686
    %v1824 = vpop.f32.mrf.mxu0
    %v1825 = vadd.f32 0.0, %v1824
    %v1826 = vpop.f32.mrf.mxu0
    %1827 = vdwg.mxu0
    %v1828 = vadd.f32 %v212, %v1825
    %v1829 = vxor.u32 %v1828, 2147483648
    %v1830 = vmul.f32 %v1829, 1.442695
    %v1831 = vpow.pop %v1830
    %v1832 = vadd.f32 %v1831, 1.0
    %v1833 = vrcp.pop %v1832
    %v1834 = vmul.f32 1.0, %v1833
    %v1835 = vtanh.pop %v1828
    %v1836 = vmul.f32 %v1834, %v1574
    %1838 = vrot.lane.b32.xlu0 %v1835, 32
    %v1839 = vpop.permute.xlu0 %1838
    %v1841 = vmul.f32 %v1834, %v1839
    %1843 = vrot.lane.b32.xlu0 %v1841, 32
    %v1844 = vpop.permute.xlu0 %1843
    %v1846 = vadd.f32 %v1836, %v1844
    %v1847 = vtanh.pop %v1846
    %1849 = vrot.lane.b32.xlu0 %v1847, 32
    %v1850 = vpop.permute.xlu0 %1849
    %v1852 = vmul.f32 %v1834, %v1850
    %v1853 = vsel %vm220, %v1680, 0
    %1855 = vmatprep.subr.mxu0 0.0
    %1856 = vmatpush1.msra.mxu0 0.0
    %1857 = vmatprep.subr.mxu0 0.0
    %1858 = vmatpush1.msra.mxu0 0.0
    %1859 = vmatprep.subr.mxu0 0.0
    %1860 = vmatpush1.msra.mxu0 0.0
    %1861 = vmatprep.subr.mxu0 0.0
    %1862 = vmatpush1.msra.mxu0 0.0
    %1863 = vmatprep.subr.mxu0 0.0
    %1864 = vmatpush1.msra.mxu0 0.0
    %1865 = vmatprep.subr.mxu0 0.0
    %1866 = vmatpush1.msra.mxu0 0.0
    %1867 = vmatprep.subr.mxu0 0.0
    %1868 = vmatpush1.msra.mxu0 0.0
    %1869 = vmatprep.subr.mxu0 0.0
    %1870 = vmatpush1.msra.mxu0 0.0
    %1871 = vmatprep.subr.mxu0 0.0
    %1872 = vmatpush1.msra.mxu0 0.0
    %1873 = vmatprep.subr.mxu0 0.0
    %1874 = vmatpush1.msra.mxu0 0.0
    %1875 = vmatprep.subr.mxu0 0.0
    %1876 = vmatpush1.msra.mxu0 0.0
    %1877 = vmatprep.subr.mxu0 0.0
    %1878 = vmatpush1.msra.mxu0 0.0
    %1879 = vmatprep.subr.mxu0 0.0
    %1880 = vmatpush1.msra.mxu0 %v68
    %1881 = vmatprep.subr.mxu0 0.0
    %1882 = vmatpush1.msra.mxu0 %v67
    %1883 = vmatprep.subr.mxu0 0.0
    %1884 = vmatpush1.msra.mxu0 %v66
    %1885 = vmatprep.subr.mxu0 0.0
    %1886 = vmatpush1.msra.mxu0 %v65
    %1887 = vmatprep.subr.mxu0 0.0
    %1888 = vmatpush2.msra.mxu0 0.0
    %1889 = vmatprep.subr.mxu0 0.0
    %1890 = vmatpush2.msra.mxu0 0.0
    %1891 = vmatprep.subr.mxu0 0.0
    %1892 = vmatpush2.msra.mxu0 0.0
    %1893 = vmatprep.subr.mxu0 0.0
    %1894 = vmatpush2.msra.mxu0 0.0
    %1895 = vmatprep.subr.mxu0 0.0
    %1896 = vmatpush2.msra.mxu0 0.0
    %1897 = vmatprep.subr.mxu0 0.0
    %1898 = vmatpush2.msra.mxu0 0.0
    %1899 = vmatprep.subr.mxu0 0.0
    %1900 = vmatpush2.msra.mxu0 0.0
    %1901 = vmatprep.subr.mxu0 0.0
    %1902 = vmatpush2.msra.mxu0 0.0
    %1903 = vmatprep.subr.mxu0 0.0
    %1904 = vmatpush2.msra.mxu0 0.0
    %1905 = vmatprep.subr.mxu0 0.0
    %1906 = vmatpush2.msra.mxu0 0.0
    %1907 = vmatprep.subr.mxu0 0.0
    %1908 = vmatpush2.msra.mxu0 0.0
    %1909 = vmatprep.subr.mxu0 0.0
    %1910 = vmatpush2.msra.mxu0 0.0
    %1911 = vmatprep.subr.mxu0 0.0
    %1912 = vmatpush2.msra.mxu0 0.0
    %1913 = vmatprep.subr.mxu0 0.0
    %1914 = vmatpush2.msra.mxu0 0.0
    %1915 = vmatprep.subr.mxu0 0.0
    %1916 = vmatpush2.msra.mxu0 0.0
    %1917 = vmatprep.subr.mxu0 0.0
    %1918 = vmatpush2.msra.mxu0 0.0
    %1919 = vmatprep.mubr.f32.mxu0 0.0
    %1920 = vmatmul.mubr.f32.gmra.mxu0 %v1853
    %v1921 = vpop.f32.mrf.mxu0
    %v1922 = vadd.f32 0.0, %v1921
    %v1923 = vpop.f32.mrf.mxu0
    %1924 = vdwg.mxu0
    %v1925 = vadd.f32 %v1755, %v1922
    %v1926 = vxor.u32 %v1925, 2147483648
    %v1927 = vmul.f32 %v1926, 1.442695
    %v1928 = vpow.pop %v1927
    %v1929 = vadd.f32 %v1928, 1.0
    %v1930 = vrcp.pop %v1929
    %v1931 = vmul.f32 1.0, %v1930
    %v1932 = vtanh.pop %v1925
    %v1933 = vmul.f32 %v1931, %v1671
    %1935 = vrot.lane.b32.xlu0 %v1932, 32
    %v1936 = vpop.permute.xlu0 %1935
    %v1938 = vmul.f32 %v1931, %v1936
    %1940 = vrot.lane.b32.xlu0 %v1938, 32
    %v1941 = vpop.permute.xlu0 %1940
    %v1943 = vadd.f32 %v1933, %v1941
    %v1944 = vtanh.pop %v1943
    %1946 = vrot.lane.b32.xlu0 %v1944, 32
    %v1947 = vpop.permute.xlu0 %1946
    %v1949 = vmul.f32 %v1931, %v1947
    %1951 = vrot.lane.b32.xlu0 %v1949, 64
    %v1952 = vpop.permute.xlu0 %1951
    %1954 = vst.msk [vmem:[#allocation2 + $0x28] sm:$0xff] %vm220, %v1952
    %1956 = vrot.lane.b32.xlu0 %v1852, 64
    %v1957 = vpop.permute.xlu0 %1956
    %v1958 = vsel %vm220, %v1957, 0
    %1960 = vmatprep.subr.mxu0 0.0
    %1961 = vmatpush1.msra.mxu0 0.0
    %1962 = vmatprep.subr.mxu0 0.0
    %1963 = vmatpush1.msra.mxu0 0.0
    %1964 = vmatprep.subr.mxu0 0.0
    %1965 = vmatpush1.msra.mxu0 0.0
    %1966 = vmatprep.subr.mxu0 0.0
    %1967 = vmatpush1.msra.mxu0 0.0
    %1968 = vmatprep.subr.mxu0 0.0
    %1969 = vmatpush1.msra.mxu0 0.0
    %1970 = vmatprep.subr.mxu0 0.0
    %1971 = vmatpush1.msra.mxu0 0.0
    %1972 = vmatprep.subr.mxu0 0.0
    %1973 = vmatpush1.msra.mxu0 0.0
    %1974 = vmatprep.subr.mxu0 0.0
    %1975 = vmatpush1.msra.mxu0 0.0
    %1976 = vmatprep.subr.mxu0 0.0
    %1977 = vmatpush1.msra.mxu0 0.0
    %1978 = vmatprep.subr.mxu0 0.0
    %1979 = vmatpush1.msra.mxu0 0.0
    %1980 = vmatprep.subr.mxu0 0.0
    %1981 = vmatpush1.msra.mxu0 0.0
    %1982 = vmatprep.subr.mxu0 0.0
    %1983 = vmatpush1.msra.mxu0 0.0
    %1984 = vmatprep.subr.mxu0 0.0
    %1985 = vmatpush1.msra.mxu0 %v72
    %1986 = vmatprep.subr.mxu0 0.0
    %1987 = vmatpush1.msra.mxu0 %v71
    %1988 = vmatprep.subr.mxu0 0.0
    %1989 = vmatpush1.msra.mxu0 %v70
    %1990 = vmatprep.subr.mxu0 0.0
    %1991 = vmatpush1.msra.mxu0 %v69
    %1992 = vmatprep.subr.mxu0 0.0
    %1993 = vmatpush2.msra.mxu0 0.0
    %1994 = vmatprep.subr.mxu0 0.0
    %1995 = vmatpush2.msra.mxu0 0.0
    %1996 = vmatprep.subr.mxu0 0.0
    %1997 = vmatpush2.msra.mxu0 0.0
    %1998 = vmatprep.subr.mxu0 0.0
    %1999 = vmatpush2.msra.mxu0 0.0
    %2000 = vmatprep.subr.mxu0 0.0
    %2001 = vmatpush2.msra.mxu0 0.0
    %2002 = vmatprep.subr.mxu0 0.0
    %2003 = vmatpush2.msra.mxu0 0.0
    %2004 = vmatprep.subr.mxu0 0.0
    %2005 = vmatpush2.msra.mxu0 0.0
    %2006 = vmatprep.subr.mxu0 0.0
    %2007 = vmatpush2.msra.mxu0 0.0
    %2008 = vmatprep.subr.mxu0 0.0
    %2009 = vmatpush2.msra.mxu0 0.0
    %2010 = vmatprep.subr.mxu0 0.0
    %2011 = vmatpush2.msra.mxu0 0.0
    %2012 = vmatprep.subr.mxu0 0.0
    %2013 = vmatpush2.msra.mxu0 0.0
    %2014 = vmatprep.subr.mxu0 0.0
    %2015 = vmatpush2.msra.mxu0 0.0
    %2016 = vmatprep.subr.mxu0 0.0
    %2017 = vmatpush2.msra.mxu0 0.0
    %2018 = vmatprep.subr.mxu0 0.0
    %2019 = vmatpush2.msra.mxu0 0.0
    %2020 = vmatprep.subr.mxu0 0.0
    %2021 = vmatpush2.msra.mxu0 0.0
    %2022 = vmatprep.subr.mxu0 0.0
    %2023 = vmatpush2.msra.mxu0 0.0
    %2024 = vmatprep.mubr.f32.mxu0 0.0
    %2025 = vmatmul.mubr.f32.gmra.mxu0 %v1958
    %v2026 = vpop.f32.mrf.mxu0
    %v2027 = vadd.f32 %v323, %v2026
    %v2028 = vpop.f32.mrf.mxu0
    %2029 = vdwg.mxu0
    %2030 = vmatprep.subr.mxu0 0.0
    %2031 = vmatpush1.msra.mxu0 0.0
    %2032 = vmatprep.subr.mxu0 0.0
    %2033 = vmatpush1.msra.mxu0 0.0
    %2034 = vmatprep.subr.mxu0 0.0
    %2035 = vmatpush1.msra.mxu0 0.0
    %2036 = vmatprep.subr.mxu0 0.0
    %2037 = vmatpush1.msra.mxu0 0.0
    %2038 = vmatprep.subr.mxu0 0.0
    %2039 = vmatpush1.msra.mxu0 0.0
    %2040 = vmatprep.subr.mxu0 0.0
    %2041 = vmatpush1.msra.mxu0 0.0
    %2042 = vmatprep.subr.mxu0 0.0
    %2043 = vmatpush1.msra.mxu0 0.0
    %2044 = vmatprep.subr.mxu0 0.0
    %2045 = vmatpush1.msra.mxu0 0.0
    %2046 = vmatprep.subr.mxu0 0.0
    %2047 = vmatpush1.msra.mxu0 0.0
    %2048 = vmatprep.subr.mxu0 0.0
    %2049 = vmatpush1.msra.mxu0 0.0
    %2050 = vmatprep.subr.mxu0 0.0
    %2051 = vmatpush1.msra.mxu0 0.0
    %2052 = vmatprep.subr.mxu0 0.0
    %2053 = vmatpush1.msra.mxu0 0.0
    %2054 = vmatprep.subr.mxu0 0.0
    %2055 = vmatpush1.msra.mxu0 %v64
    %2056 = vmatprep.subr.mxu0 0.0
    %2057 = vmatpush1.msra.mxu0 %v63
    %2058 = vmatprep.subr.mxu0 0.0
    %2059 = vmatpush1.msra.mxu0 %v62
    %2060 = vmatprep.subr.mxu0 0.0
    %2061 = vmatpush1.msra.mxu0 %v61
    %2062 = vmatprep.subr.mxu0 0.0
    %2063 = vmatpush2.msra.mxu0 0.0
    %2064 = vmatprep.subr.mxu0 0.0
    %2065 = vmatpush2.msra.mxu0 0.0
    %2066 = vmatprep.subr.mxu0 0.0
    %2067 = vmatpush2.msra.mxu0 0.0
    %2068 = vmatprep.subr.mxu0 0.0
    %2069 = vmatpush2.msra.mxu0 0.0
    %2070 = vmatprep.subr.mxu0 0.0
    %2071 = vmatpush2.msra.mxu0 0.0
    %2072 = vmatprep.subr.mxu0 0.0
    %2073 = vmatpush2.msra.mxu0 0.0
    %2074 = vmatprep.subr.mxu0 0.0
    %2075 = vmatpush2.msra.mxu0 0.0
    %2076 = vmatprep.subr.mxu0 0.0
    %2077 = vmatpush2.msra.mxu0 0.0
    %2078 = vmatprep.subr.mxu0 0.0
    %2079 = vmatpush2.msra.mxu0 0.0
    %2080 = vmatprep.subr.mxu0 0.0
    %2081 = vmatpush2.msra.mxu0 0.0
    %2082 = vmatprep.subr.mxu0 0.0
    %2083 = vmatpush2.msra.mxu0 0.0
    %2084 = vmatprep.subr.mxu0 0.0
    %2085 = vmatpush2.msra.mxu0 0.0
    %2086 = vmatprep.subr.mxu0 0.0
    %2087 = vmatpush2.msra.mxu0 0.0
    %2088 = vmatprep.subr.mxu0 0.0
    %2089 = vmatpush2.msra.mxu0 0.0
    %2090 = vmatprep.subr.mxu0 0.0
    %2091 = vmatpush2.msra.mxu0 0.0
    %2092 = vmatprep.subr.mxu0 0.0
    %2093 = vmatpush2.msra.mxu0 0.0
    %2094 = vmatprep.mubr.f32.mxu0 0.0
    %2095 = vmatmul.mubr.f32.gmra.mxu0 %v1958
    %v2096 = vpop.f32.mrf.mxu0
    %v2097 = vadd.f32 0.0, %v2096
    %v2098 = vpop.f32.mrf.mxu0
    %2099 = vdwg.mxu0
    %v2100 = vadd.f32 %v217, %v2097
    %v2101 = vxor.u32 %v2100, 2147483648
    %v2102 = vmul.f32 %v2101, 1.442695
    %v2103 = vpow.pop %v2102
    %v2104 = vadd.f32 %v2103, 1.0
    %v2105 = vrcp.pop %v2104
    %v2106 = vmul.f32 1.0, %v2105
    %v2107 = vtanh.pop %v2100
    %v2108 = vmul.f32 %v2106, %v1846
    %2110 = vrot.lane.b32.xlu0 %v2107, 32
    %v2111 = vpop.permute.xlu0 %2110
    %v2113 = vmul.f32 %v2106, %v2111
    %2115 = vrot.lane.b32.xlu0 %v2113, 32
    %v2116 = vpop.permute.xlu0 %2115
    %v2118 = vadd.f32 %v2108, %v2116
    %v2119 = vtanh.pop %v2118
    %2121 = vrot.lane.b32.xlu0 %v2119, 32
    %v2122 = vpop.permute.xlu0 %2121
    %v2124 = vmul.f32 %v2106, %v2122
    %v2125 = vsel %vm220, %v1952, 0
    %2127 = vmatprep.subr.mxu0 0.0
    %2128 = vmatpush1.msra.mxu0 0.0
    %2129 = vmatprep.subr.mxu0 0.0
    %2130 = vmatpush1.msra.mxu0 0.0
    %2131 = vmatprep.subr.mxu0 0.0
    %2132 = vmatpush1.msra.mxu0 0.0
    %2133 = vmatprep.subr.mxu0 0.0
    %2134 = vmatpush1.msra.mxu0 0.0
    %2135 = vmatprep.subr.mxu0 0.0
    %2136 = vmatpush1.msra.mxu0 0.0
    %2137 = vmatprep.subr.mxu0 0.0
    %2138 = vmatpush1.msra.mxu0 0.0
    %2139 = vmatprep.subr.mxu0 0.0
    %2140 = vmatpush1.msra.mxu0 0.0
    %2141 = vmatprep.subr.mxu0 0.0
    %2142 = vmatpush1.msra.mxu0 0.0
    %2143 = vmatprep.subr.mxu0 0.0
    %2144 = vmatpush1.msra.mxu0 0.0
    %2145 = vmatprep.subr.mxu0 0.0
    %2146 = vmatpush1.msra.mxu0 0.0
    %2147 = vmatprep.subr.mxu0 0.0
    %2148 = vmatpush1.msra.mxu0 0.0
    %2149 = vmatprep.subr.mxu0 0.0
    %2150 = vmatpush1.msra.mxu0 0.0
    %2151 = vmatprep.subr.mxu0 0.0
    %2152 = vmatpush1.msra.mxu0 %v68
    %2153 = vmatprep.subr.mxu0 0.0
    %2154 = vmatpush1.msra.mxu0 %v67
    %2155 = vmatprep.subr.mxu0 0.0
    %2156 = vmatpush1.msra.mxu0 %v66
    %2157 = vmatprep.subr.mxu0 0.0
    %2158 = vmatpush1.msra.mxu0 %v65
    %2159 = vmatprep.subr.mxu0 0.0
    %2160 = vmatpush2.msra.mxu0 0.0
    %2161 = vmatprep.subr.mxu0 0.0
    %2162 = vmatpush2.msra.mxu0 0.0
    %2163 = vmatprep.subr.mxu0 0.0
    %2164 = vmatpush2.msra.mxu0 0.0
    %2165 = vmatprep.subr.mxu0 0.0
    %2166 = vmatpush2.msra.mxu0 0.0
    %2167 = vmatprep.subr.mxu0 0.0
    %2168 = vmatpush2.msra.mxu0 0.0
    %2169 = vmatprep.subr.mxu0 0.0
    %2170 = vmatpush2.msra.mxu0 0.0
    %2171 = vmatprep.subr.mxu0 0.0
    %2172 = vmatpush2.msra.mxu0 0.0
    %2173 = vmatprep.subr.mxu0 0.0
    %2174 = vmatpush2.msra.mxu0 0.0
    %2175 = vmatprep.subr.mxu0 0.0
    %2176 = vmatpush2.msra.mxu0 0.0
    %2177 = vmatprep.subr.mxu0 0.0
    %2178 = vmatpush2.msra.mxu0 0.0
    %2179 = vmatprep.subr.mxu0 0.0
    %2180 = vmatpush2.msra.mxu0 0.0
    %2181 = vmatprep.subr.mxu0 0.0
    %2182 = vmatpush2.msra.mxu0 0.0
    %2183 = vmatprep.subr.mxu0 0.0
    %2184 = vmatpush2.msra.mxu0 0.0
    %2185 = vmatprep.subr.mxu0 0.0
    %2186 = vmatpush2.msra.mxu0 0.0
    %2187 = vmatprep.subr.mxu0 0.0
    %2188 = vmatpush2.msra.mxu0 0.0
    %2189 = vmatprep.subr.mxu0 0.0
    %2190 = vmatpush2.msra.mxu0 0.0
    %2191 = vmatprep.mubr.f32.mxu0 0.0
    %2192 = vmatmul.mubr.f32.gmra.mxu0 %v2125
    %v2193 = vpop.f32.mrf.mxu0
    %v2194 = vadd.f32 0.0, %v2193
    %v2195 = vpop.f32.mrf.mxu0
    %2196 = vdwg.mxu0
    %v2197 = vadd.f32 %v2027, %v2194
    %v2198 = vxor.u32 %v2197, 2147483648
    %v2199 = vmul.f32 %v2198, 1.442695
    %v2200 = vpow.pop %v2199
    %v2201 = vadd.f32 %v2200, 1.0
    %v2202 = vrcp.pop %v2201
    %v2203 = vmul.f32 1.0, %v2202
    %v2204 = vtanh.pop %v2197
    %v2205 = vmul.f32 %v2203, %v1943
    %2207 = vrot.lane.b32.xlu0 %v2204, 32
    %v2208 = vpop.permute.xlu0 %2207
    %v2210 = vmul.f32 %v2203, %v2208
    %2212 = vrot.lane.b32.xlu0 %v2210, 32
    %v2213 = vpop.permute.xlu0 %2212
    %v2215 = vadd.f32 %v2205, %v2213
    %v2216 = vtanh.pop %v2215
    %2218 = vrot.lane.b32.xlu0 %v2216, 32
    %v2219 = vpop.permute.xlu0 %2218
    %v2221 = vmul.f32 %v2203, %v2219
    %2223 = vrot.lane.b32.xlu0 %v2221, 64
    %v2224 = vpop.permute.xlu0 %2223
    %2226 = vst.msk [vmem:[#allocation2 + $0x30] sm:$0xff] %vm220, %v2224
    %2228 = vrot.lane.b32.xlu0 %v2124, 64
    %v2229 = vpop.permute.xlu0 %2228
    %v2230 = vsel %vm220, %v2229, 0
    %2232 = vmatprep.subr.mxu0 0.0
    %2233 = vmatpush1.msra.mxu0 0.0
    %2234 = vmatprep.subr.mxu0 0.0
    %2235 = vmatpush1.msra.mxu0 0.0
    %2236 = vmatprep.subr.mxu0 0.0
    %2237 = vmatpush1.msra.mxu0 0.0
    %2238 = vmatprep.subr.mxu0 0.0
    %2239 = vmatpush1.msra.mxu0 0.0
    %2240 = vmatprep.subr.mxu0 0.0
    %2241 = vmatpush1.msra.mxu0 0.0
    %2242 = vmatprep.subr.mxu0 0.0
    %2243 = vmatpush1.msra.mxu0 0.0
    %2244 = vmatprep.subr.mxu0 0.0
    %2245 = vmatpush1.msra.mxu0 0.0
    %2246 = vmatprep.subr.mxu0 0.0
    %2247 = vmatpush1.msra.mxu0 0.0
    %2248 = vmatprep.subr.mxu0 0.0
    %2249 = vmatpush1.msra.mxu0 0.0
    %2250 = vmatprep.subr.mxu0 0.0
    %2251 = vmatpush1.msra.mxu0 0.0
    %2252 = vmatprep.subr.mxu0 0.0
    %2253 = vmatpush1.msra.mxu0 0.0
    %2254 = vmatprep.subr.mxu0 0.0
    %2255 = vmatpush1.msra.mxu0 0.0
    %2256 = vmatprep.subr.mxu0 0.0
    %2257 = vmatpush1.msra.mxu0 %v72
    %2258 = vmatprep.subr.mxu0 0.0
    %2259 = vmatpush1.msra.mxu0 %v71
    %2260 = vmatprep.subr.mxu0 0.0
    %2261 = vmatpush1.msra.mxu0 %v70
    %2262 = vmatprep.subr.mxu0 0.0
    %2263 = vmatpush1.msra.mxu0 %v69
    %2264 = vmatprep.subr.mxu0 0.0
    %2265 = vmatpush2.msra.mxu0 0.0
    %2266 = vmatprep.subr.mxu0 0.0
    %2267 = vmatpush2.msra.mxu0 0.0
    %2268 = vmatprep.subr.mxu0 0.0
    %2269 = vmatpush2.msra.mxu0 0.0
    %2270 = vmatprep.subr.mxu0 0.0
    %2271 = vmatpush2.msra.mxu0 0.0
    %2272 = vmatprep.subr.mxu0 0.0
    %2273 = vmatpush2.msra.mxu0 0.0
    %2274 = vmatprep.subr.mxu0 0.0
    %2275 = vmatpush2.msra.mxu0 0.0
    %2276 = vmatprep.subr.mxu0 0.0
    %2277 = vmatpush2.msra.mxu0 0.0
    %2278 = vmatprep.subr.mxu0 0.0
    %2279 = vmatpush2.msra.mxu0 0.0
    %2280 = vmatprep.subr.mxu0 0.0
    %2281 = vmatpush2.msra.mxu0 0.0
    %2282 = vmatprep.subr.mxu0 0.0
    %2283 = vmatpush2.msra.mxu0 0.0
    %2284 = vmatprep.subr.mxu0 0.0
    %2285 = vmatpush2.msra.mxu0 0.0
    %2286 = vmatprep.subr.mxu0 0.0
    %2287 = vmatpush2.msra.mxu0 0.0
    %2288 = vmatprep.subr.mxu0 0.0
    %2289 = vmatpush2.msra.mxu0 0.0
    %2290 = vmatprep.subr.mxu0 0.0
    %2291 = vmatpush2.msra.mxu0 0.0
    %2292 = vmatprep.subr.mxu0 0.0
    %2293 = vmatpush2.msra.mxu0 0.0
    %2294 = vmatprep.subr.mxu0 0.0
    %2295 = vmatpush2.msra.mxu0 0.0
    %2296 = vmatprep.mubr.f32.mxu0 0.0
    %2297 = vmatmul.mubr.f32.gmra.mxu0 %v2230
    %v2298 = vpop.f32.mrf.mxu0
    %v2299 = vadd.f32 %v323, %v2298
    %v2300 = vpop.f32.mrf.mxu0
    %2301 = vdwg.mxu0
    %v2302 = vsel %vm220, %v2224, 0
    %2304 = vmatprep.subr.mxu0 0.0
    %2305 = vmatpush1.msra.mxu0 0.0
    %2306 = vmatprep.subr.mxu0 0.0
    %2307 = vmatpush1.msra.mxu0 0.0
    %2308 = vmatprep.subr.mxu0 0.0
    %2309 = vmatpush1.msra.mxu0 0.0
    %2310 = vmatprep.subr.mxu0 0.0
    %2311 = vmatpush1.msra.mxu0 0.0
    %2312 = vmatprep.subr.mxu0 0.0
    %2313 = vmatpush1.msra.mxu0 0.0
    %2314 = vmatprep.subr.mxu0 0.0
    %2315 = vmatpush1.msra.mxu0 0.0
    %2316 = vmatprep.subr.mxu0 0.0
    %2317 = vmatpush1.msra.mxu0 0.0
    %2318 = vmatprep.subr.mxu0 0.0
    %2319 = vmatpush1.msra.mxu0 0.0
    %2320 = vmatprep.subr.mxu0 0.0
    %2321 = vmatpush1.msra.mxu0 0.0
    %2322 = vmatprep.subr.mxu0 0.0
    %2323 = vmatpush1.msra.mxu0 0.0
    %2324 = vmatprep.subr.mxu0 0.0
    %2325 = vmatpush1.msra.mxu0 0.0
    %2326 = vmatprep.subr.mxu0 0.0
    %2327 = vmatpush1.msra.mxu0 0.0
    %2328 = vmatprep.subr.mxu0 0.0
    %2329 = vmatpush1.msra.mxu0 %v68
    %2330 = vmatprep.subr.mxu0 0.0
    %2331 = vmatpush1.msra.mxu0 %v67
    %2332 = vmatprep.subr.mxu0 0.0
    %2333 = vmatpush1.msra.mxu0 %v66
    %2334 = vmatprep.subr.mxu0 0.0
    %2335 = vmatpush1.msra.mxu0 %v65
    %2336 = vmatprep.subr.mxu0 0.0
    %2337 = vmatpush2.msra.mxu0 0.0
    %2338 = vmatprep.subr.mxu0 0.0
    %2339 = vmatpush2.msra.mxu0 0.0
    %2340 = vmatprep.subr.mxu0 0.0
    %2341 = vmatpush2.msra.mxu0 0.0
    %2342 = vmatprep.subr.mxu0 0.0
    %2343 = vmatpush2.msra.mxu0 0.0
    %2344 = vmatprep.subr.mxu0 0.0
    %2345 = vmatpush2.msra.mxu0 0.0
    %2346 = vmatprep.subr.mxu0 0.0
    %2347 = vmatpush2.msra.mxu0 0.0
    %2348 = vmatprep.subr.mxu0 0.0
    %2349 = vmatpush2.msra.mxu0 0.0
    %2350 = vmatprep.subr.mxu0 0.0
    %2351 = vmatpush2.msra.mxu0 0.0
    %2352 = vmatprep.subr.mxu0 0.0
    %2353 = vmatpush2.msra.mxu0 0.0
    %2354 = vmatprep.subr.mxu0 0.0
    %2355 = vmatpush2.msra.mxu0 0.0
    %2356 = vmatprep.subr.mxu0 0.0
    %2357 = vmatpush2.msra.mxu0 0.0
    %2358 = vmatprep.subr.mxu0 0.0
    %2359 = vmatpush2.msra.mxu0 0.0
    %2360 = vmatprep.subr.mxu0 0.0
    %2361 = vmatpush2.msra.mxu0 0.0
    %2362 = vmatprep.subr.mxu0 0.0
    %2363 = vmatpush2.msra.mxu0 0.0
    %2364 = vmatprep.subr.mxu0 0.0
    %2365 = vmatpush2.msra.mxu0 0.0
    %2366 = vmatprep.subr.mxu0 0.0
    %2367 = vmatpush2.msra.mxu0 0.0
    %2368 = vmatprep.mubr.f32.mxu0 0.0
    %2369 = vmatmul.mubr.f32.gmra.mxu0 %v2302
    %v2370 = vpop.f32.mrf.mxu0
    %v2371 = vadd.f32 0.0, %v2370
    %v2372 = vpop.f32.mrf.mxu0
    %2373 = vdwg.mxu0
    %v2374 = vadd.f32 %v2299, %v2371
    %v2375 = vxor.u32 %v2374, 2147483648
    %v2376 = vmul.f32 %v2375, 1.442695
    %v2377 = vpow.pop %v2376
    %v2378 = vadd.f32 %v2377, 1.0
    %v2379 = vrcp.pop %v2378
    %v2380 = vmul.f32 1.0, %v2379
    %v2381 = vtanh.pop %v2374
    %v2382 = vmul.f32 %v2380, %v2215
    %2384 = vrot.lane.b32.xlu0 %v2381, 32
    %v2385 = vpop.permute.xlu0 %2384
    %v2387 = vmul.f32 %v2380, %v2385
    %2389 = vrot.lane.b32.xlu0 %v2387, 32
    %v2390 = vpop.permute.xlu0 %2389
    %v2392 = vadd.f32 %v2382, %v2390
    %v2393 = vtanh.pop %v2392
    %2395 = vrot.lane.b32.xlu0 %v2393, 32
    %v2396 = vpop.permute.xlu0 %2395
    %v2398 = vmul.f32 %v2380, %v2396
    %2400 = vrot.lane.b32.xlu0 %v2398, 64
    %v2401 = vpop.permute.xlu0 %2400
    %2403 = vst.msk [vmem:[#allocation2 + $0x38] sm:$0xff] %vm220, %v2401
    %v2404 = vld [vmem:[#allocation2] sm:$0xff]
    %v2405 = vld [vmem:[#allocation2 + $0x8] sm:$0xff]
    %v2406 = vld [vmem:[#allocation2 + $0x10] sm:$0xff]
    %v2407 = vld [vmem:[#allocation2 + $0x18] sm:$0xff]
    %v2408 = vld [vmem:[#allocation2 + $0x20] sm:$0xff]
    %v2409 = vld [vmem:[#allocation2 + $0x28] sm:$0xff]
    %v2410 = vld [vmem:[#allocation2 + $0x30] sm:$0xff]
    %v2411 = vld [vmem:[#allocation2 + $0x38] sm:$0xff]
    %v2412 = vld [vmem:[#allocation6] sm:$0xff]
    %v2413 = vld [vmem:[#allocation6 + $0x8] sm:$0xff]
    %v2414 = vld [vmem:[#allocation6 + $0x10] sm:$0xff]
    %v2415 = vld [vmem:[#allocation6 + $0x18] sm:$0xff]
    %v2416 = vld [vmem:[%s8] sm:$0x1]
    %v2418 = vlaneseq
    %v2419 = vshrl.u32 %v2418, 7
    %v2420 = vsub.s32 0, %v2419
    %v2421 = vrot.slane %v2416, %v2420
    %v2424 = vsel %vm220, %v2404, 0
    %v2427 = vsel %vm220, %v2405, 0
    %v2430 = vsel %vm220, %v2406, 0
    %v2433 = vsel %vm220, %v2407, 0
    %v2436 = vsel %vm220, %v2408, 0
    %v2439 = vsel %vm220, %v2409, 0
    %v2442 = vsel %vm220, %v2410, 0
    %v2445 = vsel %vm220, %v2411, 0
    %2447 = vmatprep.subr.mxu0 0.0
    %2448 = vmatpush1.msra.mxu0 0.0
    %2449 = vmatprep.subr.mxu0 0.0
    %2450 = vmatpush1.msra.mxu0 0.0
    %2451 = vmatprep.subr.mxu0 0.0
    %2452 = vmatpush1.msra.mxu0 0.0
    %2453 = vmatprep.subr.mxu0 0.0
    %2454 = vmatpush1.msra.mxu0 0.0
    %2455 = vmatprep.subr.mxu0 0.0
    %2456 = vmatpush1.msra.mxu0 0.0
    %2457 = vmatprep.subr.mxu0 0.0
    %2458 = vmatpush1.msra.mxu0 0.0
    %2459 = vmatprep.subr.mxu0 0.0
    %2460 = vmatpush1.msra.mxu0 0.0
    %2461 = vmatprep.subr.mxu0 0.0
    %2462 = vmatpush1.msra.mxu0 0.0
    %2463 = vmatprep.subr.mxu0 0.0
    %2464 = vmatpush1.msra.mxu0 0.0
    %2465 = vmatprep.subr.mxu0 0.0
    %2466 = vmatpush1.msra.mxu0 0.0
    %2467 = vmatprep.subr.mxu0 0.0
    %2468 = vmatpush1.msra.mxu0 0.0
    %2469 = vmatprep.subr.mxu0 0.0
    %2470 = vmatpush1.msra.mxu0 0.0
    %2471 = vmatprep.subr.mxu0 0.0
    %2472 = vmatpush1.msra.mxu0 %v2415
    %2473 = vmatprep.subr.mxu0 0.0
    %2474 = vmatpush1.msra.mxu0 %v2414
    %2475 = vmatprep.subr.mxu0 0.0
    %2476 = vmatpush1.msra.mxu0 %v2413
    %2477 = vmatprep.subr.mxu0 0.0
    %2478 = vmatpush1.msra.mxu0 %v2412
    %2479 = vmatprep.subr.mxu0 0.0
    %2480 = vmatpush2.msra.mxu0 0.0
    %2481 = vmatprep.subr.mxu0 0.0
    %2482 = vmatpush2.msra.mxu0 0.0
    %2483 = vmatprep.subr.mxu0 0.0
    %2484 = vmatpush2.msra.mxu0 0.0
    %2485 = vmatprep.subr.mxu0 0.0
    %2486 = vmatpush2.msra.mxu0 0.0
    %2487 = vmatprep.subr.mxu0 0.0
    %2488 = vmatpush2.msra.mxu0 0.0
    %2489 = vmatprep.subr.mxu0 0.0
    %2490 = vmatpush2.msra.mxu0 0.0
    %2491 = vmatprep.subr.mxu0 0.0
    %2492 = vmatpush2.msra.mxu0 0.0
    %2493 = vmatprep.subr.mxu0 0.0
    %2494 = vmatpush2.msra.mxu0 0.0
    %2495 = vmatprep.subr.mxu0 0.0
    %2496 = vmatpush2.msra.mxu0 0.0
    %2497 = vmatprep.subr.mxu0 0.0
    %2498 = vmatpush2.msra.mxu0 0.0
    %2499 = vmatprep.subr.mxu0 0.0
    %2500 = vmatpush2.msra.mxu0 0.0
    %2501 = vmatprep.subr.mxu0 0.0
    %2502 = vmatpush2.msra.mxu0 0.0
    %2503 = vmatprep.subr.mxu0 0.0
    %2504 = vmatpush2.msra.mxu0 0.0
    %2505 = vmatprep.subr.mxu0 0.0
    %2506 = vmatpush2.msra.mxu0 0.0
    %2507 = vmatprep.subr.mxu0 0.0
    %2508 = vmatpush2.msra.mxu0 0.0
    %2509 = vmatprep.subr.mxu0 0.0
    %2510 = vmatpush2.msra.mxu0 0.0
    %2511 = vmatprep.mubr.f32.mxu0 0.0
    %2512 = vmatmul.mubr.f32.gmra.mxu0 %v2424
    %v2513 = vpop.f32.mrf.mxu0
    %v2514 = vadd.f32 %v2421, %v2513
    %v2515 = vpop.f32.mrf.mxu0
    %2516 = vmatprep.mubr.f32.mxu0 0.0
    %2517 = vmatmul.mubr.f32.gmra.mxu0 %v2427
    %v2518 = vpop.f32.mrf.mxu0
    %v2519 = vadd.f32 %v2421, %v2518
    %v2520 = vpop.f32.mrf.mxu0
    %2521 = vmatprep.mubr.f32.mxu0 0.0
    %2522 = vmatmul.mubr.f32.gmra.mxu0 %v2430
    %v2523 = vpop.f32.mrf.mxu0
    %v2524 = vadd.f32 %v2421, %v2523
    %v2525 = vpop.f32.mrf.mxu0
    %2526 = vmatprep.mubr.f32.mxu0 0.0
    %2527 = vmatmul.mubr.f32.gmra.mxu0 %v2433
    %v2528 = vpop.f32.mrf.mxu0
    %v2529 = vadd.f32 %v2421, %v2528
    %v2530 = vpop.f32.mrf.mxu0
    %2531 = vmatprep.mubr.f32.mxu0 0.0
    %2532 = vmatmul.mubr.f32.gmra.mxu0 %v2436
    %v2533 = vpop.f32.mrf.mxu0
    %v2534 = vadd.f32 %v2421, %v2533
    %v2535 = vpop.f32.mrf.mxu0
    %2536 = vmatprep.mubr.f32.mxu0 0.0
    %2537 = vmatmul.mubr.f32.gmra.mxu0 %v2439
    %v2538 = vpop.f32.mrf.mxu0
    %v2539 = vadd.f32 %v2421, %v2538
    %v2540 = vpop.f32.mrf.mxu0
    %2541 = vmatprep.mubr.f32.mxu0 0.0
    %2542 = vmatmul.mubr.f32.gmra.mxu0 %v2442
    %v2543 = vpop.f32.mrf.mxu0
    %v2544 = vadd.f32 %v2421, %v2543
    %v2545 = vpop.f32.mrf.mxu0
    %2546 = vmatprep.mubr.f32.mxu0 0.0
    %2547 = vmatmul.mubr.f32.gmra.mxu0 %v2445
    %v2548 = vpop.f32.mrf.mxu0
    %v2549 = vadd.f32 %v2421, %v2548
    %v2550 = vpop.f32.mrf.mxu0
    %2551 = vdwg.mxu0
    %2552 = vst [vmem:[#allocation8] sm:$0xff] %v2514
    %2553 = vst [vmem:[#allocation8 + $0x8] sm:$0xff] %v2519
    %2554 = vst [vmem:[#allocation8 + $0x10] sm:$0xff] %v2524
    %2555 = vst [vmem:[#allocation8 + $0x18] sm:$0xff] %v2529
    %2556 = vst [vmem:[#allocation8 + $0x20] sm:$0xff] %v2534
    %2557 = vst [vmem:[#allocation8 + $0x28] sm:$0xff] %v2539
    %2558 = vst [vmem:[#allocation8 + $0x30] sm:$0xff] %v2544
    %2559 = vst [vmem:[#allocation8 + $0x38] sm:$0xff] %v2549
    // Predicated region
    $region46: #{tpu_custom_call.1} parent=1 // pred_check
      _
    $region47: #{tpu_custom_call.1} parent=1 // pred_check_branch
      %2561 = sbr.rel (0) target = $region49
    $region48: #{tpu_custom_call.1} parent=1 // pred_region
      %s2563 = ssub.s32 1024, 1024
      %2564 = vsyncadd [#allocation5], %s2563
      %s2565 = sshll.u32 [#allocation8], 4
      %s2566 = int_to_ptr.vmem [resolvable:$true] %s2565
      %2571 = dma.vmem_to_hbm [thread:$0]  %s2566, 1024, %s9, [#allocation5], 128, 128, 8
    $region49: #{tpu_custom_call.1} parent=1 // pred_fallthru
      _
    // Predicated region
    $region50: #{tpu_custom_call.1} parent=1 // pred_check
      _
    $region51: #{tpu_custom_call.1} parent=1 // pred_check_branch
      %2573 = sbr.rel (0) target = $region53
    $region52: #{tpu_custom_call.1} parent=1 // pred_region
      %2574 = dma.done [#allocation5], 1024
    $region53: #{tpu_custom_call.1} parent=1 // pred_fallthru
      _
    %2575 = vsyncpa [#allocation4], 1
    %2576 = vsyncpa [#allocation7], 1
    %2577 = vsyncpa [#allocation5], 1

</llo_original>
